<compile_context>
chip_gen: v7x
topology: tpu7x:2x2x1
jax: 0.10.0
libtpu: 0.0.40
codegen_flags: <defaults>
</compile_context>

<pallas_src>
import functools

import jax
import jax.numpy as jnp
from jax.experimental import pallas as pl
from jax.experimental.pallas import tpu as pltpu

S = 4        # FrequencyAnalyzer scale
CLAMP = 1.0  # InvBlockExp clamp


# ------------------------------------------------------------------
# FrequencyAnalyzer kernel: area down-sample + area (replicate) up-sample
# expressed as 4 small matmuls per batch item, channels batched via
# block-diagonal matrices. x is passed flattened as (C*H, W).
# ------------------------------------------------------------------
def freq_kernel(x_ref, aw_ref, aht_ref, rh_ref, rwt_ref, low_ref, resid_ref):
    x = x_ref[0]                                                          # (C*H, W)
    xw = jnp.dot(x, aw_ref[...], preferred_element_type=jnp.float32)      # (C*H, Ws)
    low = jnp.dot(aht_ref[...], xw, preferred_element_type=jnp.float32)   # (C*Hs, Ws)
    up = jnp.dot(rh_ref[...],
                 jnp.dot(low, rwt_ref[...], preferred_element_type=jnp.float32),
                 preferred_element_type=jnp.float32)                      # (C*H, W)
    low_ref[0] = low
    resid_ref[0] = x - up


def frequency_analyzer(x):
    # x: (N, C, H, W) -> (N, 17*C, H/S, W/S)   (FrequencyAnalyzer, rev=False)
    N, C, H, W = x.shape
    Hs, Ws = H // S, W // S
    f32 = jnp.float32

    rep_h = (jnp.arange(H)[:, None] // S == jnp.arange(Hs)[None, :]).astype(f32)  # (H, Hs)
    rep_w = (jnp.arange(W)[:, None] // S == jnp.arange(Ws)[None, :]).astype(f32)  # (W, Ws)
    RH = jnp.kron(jnp.eye(C, dtype=f32), rep_h)   # (C*H, C*Hs) row replication (per channel)
    AHt = RH.T / float(S)                         # (C*Hs, C*H) row block-average
    AW = rep_w / float(S)                         # (W, Ws)     col block-average
    RWt = rep_w.T                                 # (Ws, W)     col replication

    x2d = x.reshape(N, C * H, W)
    low2d, resid2d = pl.pallas_call(
        freq_kernel,
        out_shape=(jax.ShapeDtypeStruct((N, C * Hs, Ws), f32),
                   jax.ShapeDtypeStruct((N, C * H, W), f32)),
        grid=(N,),
        in_specs=[pl.BlockSpec((1, C * H, W), lambda n: (n, 0, 0)),
                  pl.BlockSpec((W, Ws), lambda n: (0, 0)),
                  pl.BlockSpec((C * Hs, C * H), lambda n: (0, 0)),
                  pl.BlockSpec((C * H, C * Hs), lambda n: (0, 0)),
                  pl.BlockSpec((Ws, W), lambda n: (0, 0))],
        out_specs=(pl.BlockSpec((1, C * Hs, Ws), lambda n: (n, 0, 0)),
                   pl.BlockSpec((1, C * H, W), lambda n: (n, 0, 0))),
        compiler_params=pltpu.CompilerParams(dimension_semantics=("parallel",)),
    )(x2d, AW, AHt, RH, RWt)

    low = low2d.reshape(N, C, Hs, Ws)
    resid = resid2d.reshape(N, C, H, W)
    # PixelUnshuffle with the reference (s1, s2, c) channel ordering (pure layout, XLA).
    hf = resid.reshape(N, C, Hs, S, Ws, S).transpose(0, 3, 5, 1, 2, 4)
    hf = hf.reshape(N, C * S * S, Hs, Ws)
    return jnp.concatenate([low, hf], axis=1)


# ------------------------------------------------------------------
# Fused multi-block InvBlockExp kernel (rev=False):
#   per block:  y1 = x1 + F(x2); s = clamp*(sigmoid(H(y1))*2-1); y2 = x2*exp(s) + G(y1)
# Grid = (batch, num_blocks).  The (x1, x2) state is carried across the block axis
# in VMEM scratch; per-block weights are streamed via the block axis of the grid.
# Layout: (channels, hw) with hw on the lane axis.
# ------------------------------------------------------------------
def inv_blocks_kernel(x1_ref, x2_ref, wf_ref, bf_ref, whg_ref, bhg_ref,
                      y1_ref, y2_ref,
                      x1_s, x2_s, pbuf2, pbuf1, col2, col1,
                      *, h, w, c1p, c2, clamp):
    hw = h * w
    pad = w + 1
    blk = pl.program_id(1)

    # Column-boundary masks for the dx = -1 / dx = +1 taps; row boundaries are
    # handled by the zero padding of the flat buffer.
    xs = jax.lax.broadcasted_iota(jnp.int32, (1, hw), 1) % w
    mask_l = (xs >= 1).astype(jnp.float32)       # invalid where x == 0
    mask_r = (xs <= w - 2).astype(jnp.float32)   # invalid where x == w-1

    # First block of this batch item: load the state from HBM inputs into scratch.
    @pl.when(blk == 0)
    def _():
        x1_s[...] = x1_ref[0]
        x2_s[...] = x2_ref[0]

    def im2col(src, pbuf, colbuf, cin):
        # src: (cin, hw) value.  colbuf rows [k*cin, (k+1)*cin) <- tap k (k = ky*3+kx).
        pbuf[...] = jnp.zeros_like(pbuf)
        pbuf[:, pl.ds(pad, hw)] = src
        k = 0
        for dy in (-1, 0, 1):
            for dx in (-1, 0, 1):
                tap = pbuf[:, pl.ds(pad + dy * w + dx, hw)]      # (cin, hw) static slice
                if dx == -1:
                    tap = tap * mask_l
                elif dx == 1:
                    tap = tap * mask_r
                colbuf[pl.ds(k * cin, cin), :] = tap
                k += 1

    x2 = x2_s[...]                                               # (c2, hw)
    im2col(x2, pbuf2, col2, c2)
    # F(x2): one K = 9*c2 MXU matmul, lane-dense (cout, hw) output.
    f_out = jnp.dot(wf_ref[0], col2[...],
                    preferred_element_type=jnp.float32) + bf_ref[0]
    y1 = x1_s[...] + f_out                                       # (c1p, hw), pad rows stay 0

    im2col(y1, pbuf1, col1, c1p)
    # H(y1) and G(y1) fused into one K = 9*c1p matmul with 2*c2 output rows.
    hg = jnp.dot(whg_ref[0], col1[...],
                 preferred_element_type=jnp.float32) + bhg_ref[0]
    s = clamp * (jax.nn.sigmoid(hg[:c2, :]) * 2.0 - 1.0)
    y2 = x2 * jnp.exp(s) + hg[c2:, :]

    # Carry the state to the next block and keep the output buffer current
    # (write-back to HBM happens once per batch item, after the last block).
    x1_s[...] = y1
    x2_s[...] = y2
    y1_ref[0] = y1
    y2_ref[0] = y2


def _call_inv_blocks(x1, x2, wF, bF, wHG, bHG, h, w):
    N, c1p, hw = x1.shape
    c2 = x2.shape[1]
    nb = wF.shape[0]
    pbw = hw + 2 * (w + 1)
    kernel = functools.partial(inv_blocks_kernel, h=h, w=w, c1p=c1p, c2=c2, clamp=CLAMP)
    return pl.pallas_call(
        kernel,
        out_shape=(jax.ShapeDtypeStruct((N, c1p, hw), jnp.float32),
                   jax.ShapeDtypeStruct((N, c2, hw), jnp.float32)),
        grid=(N, nb),
        in_specs=[pl.BlockSpec((1, c1p, hw), lambda n, b: (n, 0, 0)),
                  pl.BlockSpec((1, c2, hw), lambda n, b: (n, 0, 0)),
                  pl.BlockSpec((1, c1p, 9 * c2), lambda n, b: (b, 0, 0)),
                  pl.BlockSpec((1, c1p, 1), lambda n, b: (b, 0, 0)),
                  pl.BlockSpec((1, 2 * c2, 9 * c1p), lambda n, b: (b, 0, 0)),
                  pl.BlockSpec((1, 2 * c2, 1), lambda n, b: (b, 0, 0))],
        out_specs=(pl.BlockSpec((1, c1p, hw), lambda n, b: (n, 0, 0)),
                   pl.BlockSpec((1, c2, hw), lambda n, b: (n, 0, 0))),
        scratch_shapes=[pltpu.VMEM((c1p, hw), jnp.float32),       # carried x1 state
                        pltpu.VMEM((c2, hw), jnp.float32),        # carried x2 state
                        pltpu.VMEM((c2, pbw), jnp.float32),       # padded flat x2
                        pltpu.VMEM((c1p, pbw), jnp.float32),      # padded flat y1
                        pltpu.VMEM((9 * c2, hw), jnp.float32),    # im2col(x2)
                        pltpu.VMEM((9 * c1p, hw), jnp.float32)],  # im2col(y1)
        compiler_params=pltpu.CompilerParams(
            dimension_semantics=("parallel", "arbitrary")),
    )(x1, x2, wF, bF, wHG, bHG)


def _fold_block_params(blk, c1p):
    # Fold torch-layout (cout, cin, 3, 3) weights into the kernel layout:
    #   wF  -> (c1p, 9*c2)          column index = (ky*3+kx)*c2  + cin
    #   wHG -> (2*c2, 9*c1p)        rows 0..c2-1 = H, rows c2.. = G
    wF, bF = blk["wF"], blk["bF"]
    wG, bG = blk["wG"], blk["bG"]
    wH, bH = blk["wH"], blk["bH"]
    c1, c2 = wF.shape[0], wF.shape[1]
    wFp = jnp.pad(wF, ((0, c1p - c1), (0, 0), (0, 0), (0, 0)))
    wF_fold = wFp.transpose(0, 2, 3, 1).reshape(c1p, 9 * c2)
    bF_fold = jnp.pad(bF, (0, c1p - c1)).reshape(c1p, 1)
    wHp = jnp.pad(wH, ((0, 0), (0, c1p - c1), (0, 0), (0, 0)))
    wGp = jnp.pad(wG, ((0, 0), (0, c1p - c1), (0, 0), (0, 0)))
    wHG_fold = jnp.concatenate([wHp, wGp], axis=0).transpose(0, 2, 3, 1)
    wHG_fold = wHG_fold.reshape(2 * c2, 9 * c1p)
    bHG_fold = jnp.concatenate([bH, bG]).reshape(2 * c2, 1)
    return wF_fold, bF_fold, wHG_fold, bHG_fold


def selfc_invnet_forward(x, params, channel_out=3):
    # SelfCInvNet.forward(x, rev=False, cal_jacobian=False)
    N, C, H, W = x.shape
    Hs, Ws = H // S, W // S
    feat = frequency_analyzer(x)                     # (N, 17*C, Hs, Ws)
    ctot = feat.shape[1]
    c1 = channel_out
    c1p = ((c1 + 7) // 8) * 8                        # pad split-1 channels to sublane tile
    hw = Hs * Ws

    flat = feat.reshape(N, ctot, hw)                 # channels-first, spatial on lanes
    x1 = jnp.pad(flat[:, :c1, :], ((0, 0), (0, c1p - c1), (0, 0)))
    x2 = flat[:, c1:, :]

    # Stack all per-block folded weights so a single fused pallas_call runs every
    # coupling block back-to-back with the state resident in VMEM.
    folded = [_fold_block_params(blk, c1p) for blk in params["blocks"]]
    wF = jnp.stack([f[0] for f in folded])           # (NB, c1p, 9*c2)
    bF = jnp.stack([f[1] for f in folded])           # (NB, c1p, 1)
    wHG = jnp.stack([f[2] for f in folded])          # (NB, 2*c2, 9*c1p)
    bHG = jnp.stack([f[3] for f in folded])          # (NB, 2*c2, 1)

    y1, y2 = _call_inv_blocks(x1, x2, wF, bF, wHG, bHG, Hs, Ws)

    out = jnp.concatenate([y1[:, :c1, :], y2], axis=1).reshape(N, ctot, Hs, Ws)
    loss_c = jnp.mean(out) * 0.0
    return out, loss_c


# ------------------------------------------------------------------
# Pure JAX/XLA reference (same math, standard conv) for validation.
# ------------------------------------------------------------------
def _conv3x3_ref(x, w, b):
    out = jax.lax.conv_general_dilated(
        x, w, window_strides=(1, 1), padding=((1, 1), (1, 1)),
        dimension_numbers=("NCHW", "OIHW", "NCHW"))
    return out + b.reshape(1, -1, 1, 1)


def reference_forward(x, params, channel_out=3):
    N, C, H, W = x.shape
    Hs, Ws = H // S, W // S
    low = x.reshape(N, C, Hs, S, Ws, S).mean(axis=(3, 5))
    up = jnp.repeat(jnp.repeat(low, S, axis=2), S, axis=3)
    resid = x - up
    hf = resid.reshape(N, C, Hs, S, Ws, S).transpose(0, 3, 5, 1, 2, 4)
    hf = hf.reshape(N, C * S * S, Hs, Ws)
    feat = jnp.concatenate([low, hf], axis=1)
    c1 = channel_out
    for blk in params["blocks"]:
        x1, x2 = feat[:, :c1], feat[:, c1:]
        y1 = x1 + _conv3x3_ref(x2, blk["wF"], blk["bF"])
        s = CLAMP * (jax.nn.sigmoid(_conv3x3_ref(y1, blk["wH"], blk["bH"])) * 2.0 - 1.0)
        y2 = x2 * jnp.exp(s) + _conv3x3_ref(y1, blk["wG"], blk["bG"])
        feat = jnp.concatenate([y1, y2], axis=1)
    return feat, jnp.mean(feat) * 0.0


# ------------------------------------------------------------------
# Deterministic parameter init (torch conv layout: (cout, cin, 3, 3)).
# ------------------------------------------------------------------
def init_conv(key, cin, cout):
    kw, kb = jax.random.split(key)
    scale = (2.0 / (9.0 * (cin + cout))) ** 0.5          # xavier-normal style
    w = jax.random.normal(kw, (cout, cin, 3, 3), jnp.float32) * scale
    b = jax.random.normal(kb, (cout,), jnp.float32) * 0.01
    return w, b


if __name__ == "__main__":
    key = jax.random.PRNGKey(0)
    kx, kp = jax.random.split(key)

    N, C, H, W = 2, 3, 16, 16            # bt=2 frames, RGB, 16x16
    channel_out = 3
    down_num, block_num = 1, [2]
    current_channel = C * 17             # 51 after FrequencyAnalyzer

    x = jax.random.normal(kx, (N, C, H, W), jnp.float32)

    blocks = []
    keys = jax.random.split(kp, sum(block_num) * 3)
    idx = 0
    for i in range(down_num):
        for j in range(block_num[i]):
            c1 = channel_out
            c2 = current_channel - channel_out
            wF, bF = init_conv(keys[idx], c2, c1); idx += 1
            wG, bG = init_conv(keys[idx], c1, c2); idx += 1
            wH, bH = init_conv(keys[idx], c1, c2); idx += 1
            blocks.append(dict(wF=wF, bF=bF, wG=wG, bG=bG, wH=wH, bH=bH))
    params = dict(blocks=blocks)

    fwd = jax.jit(functools.partial(selfc_invnet_forward, channel_out=channel_out))
    out, loss_c = fwd(x, params)
    jax.block_until_ready(out)
    jax.block_until_ready(loss_c)

    assert out.shape == (N, current_channel, H // S, W // S), out.shape
    assert out.dtype == jnp.float32

    # Validate the Pallas path against the pure-JAX reference.
    ref_fwd = jax.jit(functools.partial(reference_forward, channel_out=channel_out))
    ref_out, _ = ref_fwd(x, params)
    jax.block_until_ready(ref_out)
    max_err = float(jnp.max(jnp.abs(out - ref_out)))
    scale = float(jnp.max(jnp.abs(ref_out))) + 1e-6
    assert max_err / scale < 5e-3, f"kernel mismatch: max_err={max_err}, scale={scale}"

    print("KERNEL_OK")
</pallas_src>

<mosaic_0001>
module attributes {stable_mosaic.version = 11 : i64} {
  func.func @freq_kernel(%arg0: i32, %arg1: memref<1x48x16xf32, #tpu.memory_space<vmem>>, %arg2: memref<16x4xf32, #tpu.memory_space<vmem>>, %arg3: memref<12x48xf32, #tpu.memory_space<vmem>>, %arg4: memref<48x12xf32, #tpu.memory_space<vmem>>, %arg5: memref<4x16xf32, #tpu.memory_space<vmem>>, %arg6: memref<1x12x4xf32, #tpu.memory_space<vmem>>, %arg7: memref<1x48x16xf32, #tpu.memory_space<vmem>>) attributes {dimension_semantics = [#tpu.dimension_semantics<parallel>], iteration_bounds = array<i64: 2>, scalar_prefetch = 0 : i64, scratch_operands = 0 : i64, tpu.core_type = #tpu.core_type<tc>, window_params = [{transform_indices = @transform_0, window_bounds = array<i64: 1, 48, 16>}, {pipeline_mode = #tpu.pipeline_mode<synchronous>, transform_indices = @transform_1, window_bounds = array<i64: 16, 4>}, {pipeline_mode = #tpu.pipeline_mode<synchronous>, transform_indices = @transform_2, window_bounds = array<i64: 12, 48>}, {pipeline_mode = #tpu.pipeline_mode<synchronous>, transform_indices = @transform_3, window_bounds = array<i64: 48, 12>}, {pipeline_mode = #tpu.pipeline_mode<synchronous>, transform_indices = @transform_4, window_bounds = array<i64: 4, 16>}, {transform_indices = @transform_5, window_bounds = array<i64: 1, 12, 4>}, {transform_indices = @transform_6, window_bounds = array<i64: 1, 48, 16>}]} {
    %c0 = arith.constant 0 : index
    %c0_0 = arith.constant 0 : index
    %c0_1 = arith.constant 0 : index
    %0 = vector.load %arg1[%c0, %c0_0, %c0_1] : memref<1x48x16xf32, #tpu.memory_space<vmem>>, vector<1x48x16xf32>
    %1 = vector.shape_cast %0 : vector<1x48x16xf32> to vector<48x16xf32>
    %c0_2 = arith.constant 0 : index
    %c0_3 = arith.constant 0 : index
    %2 = vector.load %arg2[%c0_2, %c0_3] : memref<16x4xf32, #tpu.memory_space<vmem>>, vector<16x4xf32>
    %cst = arith.constant dense<0.000000e+00> : vector<48x4xf32>
    %3 = tpu.matmul %1, %2, %cst {dimension_numbers = #tpu.dot_dimension_numbers<[1], [0], [0], [1], [0, 0, 1, 1], [], []>} : vector<48x16xf32>, vector<16x4xf32>, vector<48x4xf32> -> vector<48x4xf32>
    %c0_4 = arith.constant 0 : index
    %c0_5 = arith.constant 0 : index
    %4 = vector.load %arg3[%c0_4, %c0_5] : memref<12x48xf32, #tpu.memory_space<vmem>>, vector<12x48xf32>
    %cst_6 = arith.constant dense<0.000000e+00> : vector<12x4xf32>
    %5 = tpu.matmul %4, %3, %cst_6 {dimension_numbers = #tpu.dot_dimension_numbers<[1], [0], [0], [1], [0, 0, 1, 1], [], []>} : vector<12x48xf32>, vector<48x4xf32>, vector<12x4xf32> -> vector<12x4xf32>
    %c0_7 = arith.constant 0 : index
    %c0_8 = arith.constant 0 : index
    %6 = vector.load %arg4[%c0_7, %c0_8] : memref<48x12xf32, #tpu.memory_space<vmem>>, vector<48x12xf32>
    %c0_9 = arith.constant 0 : index
    %c0_10 = arith.constant 0 : index
    %7 = vector.load %arg5[%c0_9, %c0_10] : memref<4x16xf32, #tpu.memory_space<vmem>>, vector<4x16xf32>
    %cst_11 = arith.constant dense<0.000000e+00> : vector<12x16xf32>
    %8 = tpu.matmul %5, %7, %cst_11 {dimension_numbers = #tpu.dot_dimension_numbers<[1], [0], [0], [1], [0, 0, 1, 1], [], []>} : vector<12x4xf32>, vector<4x16xf32>, vector<12x16xf32> -> vector<12x16xf32>
    %cst_12 = arith.constant dense<0.000000e+00> : vector<48x16xf32>
    %9 = tpu.matmul %6, %8, %cst_12 {dimension_numbers = #tpu.dot_dimension_numbers<[1], [0], [0], [1], [0, 0, 1, 1], [], []>} : vector<48x12xf32>, vector<12x16xf32>, vector<48x16xf32> -> vector<48x16xf32>
    %c0_13 = arith.constant 0 : index
    %c0_14 = arith.constant 0 : index
    %c0_15 = arith.constant 0 : index
    %10 = vector.load %arg6[%c0_13, %c0_14, %c0_15] : memref<1x12x4xf32, #tpu.memory_space<vmem>>, vector<1x12x4xf32>
    %11 = vector.shape_cast %10 : vector<1x12x4xf32> to vector<12x4xf32>
    %12 = vector.shape_cast %5 : vector<12x4xf32> to vector<1x12x4xf32>
    tpu.vector_store %arg6[%c0_13, %c0_14, %c0_15], %12 {strides = array<i32>} : memref<1x12x4xf32, #tpu.memory_space<vmem>>, vector<1x12x4xf32>,
    %13 = arith.subf %1, %9 : vector<48x16xf32>
    %c0_16 = arith.constant 0 : index
    %c0_17 = arith.constant 0 : index
    %c0_18 = arith.constant 0 : index
    %14 = vector.load %arg7[%c0_16, %c0_17, %c0_18] : memref<1x48x16xf32, #tpu.memory_space<vmem>>, vector<1x48x16xf32>
    %15 = vector.shape_cast %14 : vector<1x48x16xf32> to vector<48x16xf32>
    %16 = vector.shape_cast %13 : vector<48x16xf32> to vector<1x48x16xf32>
    tpu.vector_store %arg7[%c0_16, %c0_17, %c0_18], %16 {strides = array<i32>} : memref<1x48x16xf32, #tpu.memory_space<vmem>>, vector<1x48x16xf32>,
    return
  }
  func.func @transform_0(%arg0: i32) -> (i32, i32, i32) {
    %c0_i32 = arith.constant 0 : i32
    %c0_i32_0 = arith.constant 0 : i32
    %c0_i32_1 = arith.constant 0 : i32
    return %arg0, %c0_i32, %c0_i32_0 : i32, i32, i32
  }
  func.func @transform_1(%arg0: i32) -> (i32, i32) {
    %c0_i32 = arith.constant 0 : i32
    %c0_i32_0 = arith.constant 0 : i32
    %c0_i32_1 = arith.constant 0 : i32
    return %c0_i32, %c0_i32_0 : i32, i32
  }
  func.func @transform_2(%arg0: i32) -> (i32, i32) {
    %c0_i32 = arith.constant 0 : i32
    %c0_i32_0 = arith.constant 0 : i32
    %c0_i32_1 = arith.constant 0 : i32
    return %c0_i32, %c0_i32_0 : i32, i32
  }
  func.func @transform_3(%arg0: i32) -> (i32, i32) {
    %c0_i32 = arith.constant 0 : i32
    %c0_i32_0 = arith.constant 0 : i32
    %c0_i32_1 = arith.constant 0 : i32
    return %c0_i32, %c0_i32_0 : i32, i32
  }
  func.func @transform_4(%arg0: i32) -> (i32, i32) {
    %c0_i32 = arith.constant 0 : i32
    %c0_i32_0 = arith.constant 0 : i32
    %c0_i32_1 = arith.constant 0 : i32
    return %c0_i32, %c0_i32_0 : i32, i32
  }
  func.func @transform_5(%arg0: i32) -> (i32, i32, i32) {
    %c0_i32 = arith.constant 0 : i32
    %c0_i32_0 = arith.constant 0 : i32
    %c0_i32_1 = arith.constant 0 : i32
    return %arg0, %c0_i32, %c0_i32_0 : i32, i32, i32
  }
  func.func @transform_6(%arg0: i32) -> (i32, i32, i32) {
    %c0_i32 = arith.constant 0 : i32
    %c0_i32_0 = arith.constant 0 : i32
    %c0_i32_1 = arith.constant 0 : i32
    return %arg0, %c0_i32, %c0_i32_0 : i32, i32, i32
  }
}

module attributes {stable_mosaic.version = 11 : i64} {
  func.func @inv_blocks_kernel(%arg0: i32, %arg1: i32, %arg2: memref<1x8x16xf32, #tpu.memory_space<vmem>>, %arg3: memref<1x48x16xf32, #tpu.memory_space<vmem>>, %arg4: memref<1x8x432xf32, #tpu.memory_space<vmem>>, %arg5: memref<1x8x1xf32, #tpu.memory_space<vmem>>, %arg6: memref<1x96x72xf32, #tpu.memory_space<vmem>>, %arg7: memref<1x96x1xf32, #tpu.memory_space<vmem>>, %arg8: memref<1x8x16xf32, #tpu.memory_space<vmem>>, %arg9: memref<1x48x16xf32, #tpu.memory_space<vmem>>, %arg10: memref<8x16xf32, #tpu.memory_space<vmem>>, %arg11: memref<48x16xf32, #tpu.memory_space<vmem>>, %arg12: memref<48x26xf32, #tpu.memory_space<vmem>>, %arg13: memref<8x26xf32, #tpu.memory_space<vmem>>, %arg14: memref<432x16xf32, #tpu.memory_space<vmem>>, %arg15: memref<72x16xf32, #tpu.memory_space<vmem>>) attributes {dimension_semantics = [#tpu.dimension_semantics<parallel>, #tpu.dimension_semantics<arbitrary>], iteration_bounds = array<i64: 2, 2>, scalar_prefetch = 0 : i64, scratch_operands = 6 : i64, tpu.core_type = #tpu.core_type<tc>, window_params = [{transform_indices = @transform_0, window_bounds = array<i64: 1, 8, 16>}, {transform_indices = @transform_1, window_bounds = array<i64: 1, 48, 16>}, {transform_indices = @transform_2, window_bounds = array<i64: 1, 8, 432>}, {transform_indices = @transform_3, window_bounds = array<i64: 1, 8, 1>}, {transform_indices = @transform_4, window_bounds = array<i64: 1, 96, 72>}, {transform_indices = @transform_5, window_bounds = array<i64: 1, 96, 1>}, {transform_indices = @transform_6, window_bounds = array<i64: 1, 8, 16>}, {transform_indices = @transform_7, window_bounds = array<i64: 1, 48, 16>}]} {
    %0 = tpu.iota {dimensions = array<i32: 1>} : vector<1x16xi32>
    %c4_i32 = arith.constant 4 : i32
    %c0_i32 = arith.constant 0 : i32
    %1 = arith.cmpi eq, %c4_i32, %c0_i32 : i32
    %c1_i32 = arith.constant 1 : i32
    %2 = arith.select %1, %c1_i32, %c4_i32 : i32
    %3 = vector.broadcast %2 : i32 to vector<1x16xi32>
    %4 = arith.remsi %0, %3 : vector<1x16xi32>
    %c0_i32_0 = arith.constant 0 : i32
    %5 = vector.broadcast %c0_i32_0 : i32 to vector<1x16xi32>
    %6 = arith.cmpi ne, %4, %5 : vector<1x16xi32>
    %c0_i32_1 = arith.constant 0 : i32
    %7 = vector.broadcast %c0_i32_1 : i32 to vector<1x16xi32>
    %8 = arith.cmpi slt, %4, %7 : vector<1x16xi32>
    %c0_i32_2 = arith.constant 0 : i32
    %9 = arith.cmpi slt, %2, %c0_i32_2 : i32
    %10 = vector.broadcast %9 : i1 to vector<1x16xi1>
    %11 = vector.broadcast %10 : vector<1x16xi1> to vector<1x16xi1>
    %12 = arith.xori %8, %11 : vector<1x16xi1>
    %13 = arith.andi %12, %6 : vector<1x16xi1>
    %14 = vector.broadcast %2 : i32 to vector<1x16xi32>
    %15 = arith.addi %4, %14 : vector<1x16xi32>
    %16 = arith.select %13, %15, %4 : vector<1x16xi1>, vector<1x16xi32>
    %c1_i32_3 = arith.constant 1 : i32
    %17 = vector.broadcast %c1_i32_3 : i32 to vector<1x16xi32>
    %18 = arith.cmpi sge, %16, %17 : vector<1x16xi32>
    %19 = arith.extui %18 : vector<1x16xi1> to vector<1x16xi32>
    %20 = arith.sitofp %19 : vector<1x16xi32> to vector<1x16xf32>
    %c2_i32 = arith.constant 2 : i32
    %21 = vector.broadcast %c2_i32 : i32 to vector<1x16xi32>
    %22 = arith.cmpi sle, %16, %21 : vector<1x16xi32>
    %23 = arith.extui %22 : vector<1x16xi1> to vector<1x16xi32>
    %24 = arith.sitofp %23 : vector<1x16xi32> to vector<1x16xf32>
    %c0_i32_4 = arith.constant 0 : i32
    %25 = arith.cmpi eq, %arg1, %c0_i32_4 : i32
    %26 = arith.extui %25 : i1 to i32
    %c0_i32_5 = arith.constant 0 : i32
    %27 = arith.cmpi ne, %26, %c0_i32_5 : i32
    scf.if %27 {
      %c0_100 = arith.constant 0 : index
      %c0_101 = arith.constant 0 : index
      %c0_102 = arith.constant 0 : index
      %137 = vector.load %arg2[%c0_100, %c0_101, %c0_102] : memref<1x8x16xf32, #tpu.memory_space<vmem>>, vector<1x8x16xf32>
      %138 = vector.shape_cast %137 : vector<1x8x16xf32> to vector<8x16xf32>
      %c0_103 = arith.constant 0 : index
      %c0_104 = arith.constant 0 : index
      %139 = vector.load %arg10[%c0_103, %c0_104] : memref<8x16xf32, #tpu.memory_space<vmem>>, vector<8x16xf32>
      tpu.vector_store %arg10[%c0_103, %c0_104], %138 {strides = array<i32>} : memref<8x16xf32, #tpu.memory_space<vmem>>, vector<8x16xf32>,
      %c0_105 = arith.constant 0 : index
      %c0_106 = arith.constant 0 : index
      %c0_107 = arith.constant 0 : index
      %140 = vector.load %arg3[%c0_105, %c0_106, %c0_107] : memref<1x48x16xf32, #tpu.memory_space<vmem>>, vector<1x48x16xf32>
      %141 = vector.shape_cast %140 : vector<1x48x16xf32> to vector<48x16xf32>
      %c0_108 = arith.constant 0 : index
      %c0_109 = arith.constant 0 : index
      %142 = vector.load %arg11[%c0_108, %c0_109] : memref<48x16xf32, #tpu.memory_space<vmem>>, vector<48x16xf32>
      tpu.vector_store %arg11[%c0_108, %c0_109], %141 {strides = array<i32>} : memref<48x16xf32, #tpu.memory_space<vmem>>, vector<48x16xf32>,
    } else {
    }
    %c0 = arith.constant 0 : index
    %c0_6 = arith.constant 0 : index
    %28 = vector.load %arg11[%c0, %c0_6] : memref<48x16xf32, #tpu.memory_space<vmem>>, vector<48x16xf32>
    %cst = arith.constant 0.000000e+00 : f32
    %29 = vector.broadcast %cst : f32 to vector<48x26xf32>
    %c0_7 = arith.constant 0 : index
    %c0_8 = arith.constant 0 : index
    %30 = vector.load %arg12[%c0_7, %c0_8] : memref<48x26xf32, #tpu.memory_space<vmem>>, vector<48x26xf32>
    tpu.vector_store %arg12[%c0_7, %c0_8], %29 {strides = array<i32>} : memref<48x26xf32, #tpu.memory_space<vmem>>, vector<48x26xf32>,
    %c0_9 = arith.constant 0 : index
    %c5 = arith.constant 5 : index
    %31 = vector.load %arg12[%c0_9, %c5] : memref<48x26xf32, #tpu.memory_space<vmem>>, vector<48x16xf32>
    tpu.vector_store %arg12[%c0_9, %c5], %28 {strides = array<i32>} : memref<48x26xf32, #tpu.memory_space<vmem>>, vector<48x16xf32>,
    %c0_10 = arith.constant 0 : index
    %c0_11 = arith.constant 0 : index
    %32 = vector.load %arg12[%c0_10, %c0_11] : memref<48x26xf32, #tpu.memory_space<vmem>>, vector<48x16xf32>
    %33 = vector.broadcast %20 : vector<1x16xf32> to vector<48x16xf32>
    %34 = arith.mulf %32, %33 : vector<48x16xf32>
    %c0_12 = arith.constant 0 : index
    %c0_13 = arith.constant 0 : index
    %35 = vector.load %arg14[%c0_12, %c0_13] : memref<432x16xf32, #tpu.memory_space<vmem>>, vector<48x16xf32>
    tpu.vector_store %arg14[%c0_12, %c0_13], %34 {strides = array<i32>} : memref<432x16xf32, #tpu.memory_space<vmem>>, vector<48x16xf32>,
    %c0_14 = arith.constant 0 : index
    %c1 = arith.constant 1 : index
    %36 = vector.load %arg12[%c0_14, %c1] : memref<48x26xf32, #tpu.memory_space<vmem>>, vector<48x16xf32>
    %c48 = arith.constant 48 : index
    %c0_15 = arith.constant 0 : index
    %37 = vector.load %arg14[%c48, %c0_15] : memref<432x16xf32, #tpu.memory_space<vmem>>, vector<48x16xf32>
    tpu.vector_store %arg14[%c48, %c0_15], %36 {strides = array<i32>} : memref<432x16xf32, #tpu.memory_space<vmem>>, vector<48x16xf32>,
    %c0_16 = arith.constant 0 : index
    %c2 = arith.constant 2 : index
    %38 = vector.load %arg12[%c0_16, %c2] : memref<48x26xf32, #tpu.memory_space<vmem>>, vector<48x16xf32>
    %39 = vector.broadcast %24 : vector<1x16xf32> to vector<48x16xf32>
    %40 = arith.mulf %38, %39 : vector<48x16xf32>
    %c96 = arith.constant 96 : index
    %c0_17 = arith.constant 0 : index
    %41 = vector.load %arg14[%c96, %c0_17] : memref<432x16xf32, #tpu.memory_space<vmem>>, vector<48x16xf32>
    tpu.vector_store %arg14[%c96, %c0_17], %40 {strides = array<i32>} : memref<432x16xf32, #tpu.memory_space<vmem>>, vector<48x16xf32>,
    %c0_18 = arith.constant 0 : index
    %c4 = arith.constant 4 : index
    %42 = vector.load %arg12[%c0_18, %c4] : memref<48x26xf32, #tpu.memory_space<vmem>>, vector<48x16xf32>
    %43 = vector.broadcast %20 : vector<1x16xf32> to vector<48x16xf32>
    %44 = arith.mulf %42, %43 : vector<48x16xf32>
    %c144 = arith.constant 144 : index
    %c0_19 = arith.constant 0 : index
    %45 = vector.load %arg14[%c144, %c0_19] : memref<432x16xf32, #tpu.memory_space<vmem>>, vector<48x16xf32>
    tpu.vector_store %arg14[%c144, %c0_19], %44 {strides = array<i32>} : memref<432x16xf32, #tpu.memory_space<vmem>>, vector<48x16xf32>,
    %c0_20 = arith.constant 0 : index
    %c5_21 = arith.constant 5 : index
    %46 = vector.load %arg12[%c0_20, %c5_21] : memref<48x26xf32, #tpu.memory_space<vmem>>, vector<48x16xf32>
    %c192 = arith.constant 192 : index
    %c0_22 = arith.constant 0 : index
    %47 = vector.load %arg14[%c192, %c0_22] : memref<432x16xf32, #tpu.memory_space<vmem>>, vector<48x16xf32>
    tpu.vector_store %arg14[%c192, %c0_22], %46 {strides = array<i32>} : memref<432x16xf32, #tpu.memory_space<vmem>>, vector<48x16xf32>,
    %c0_23 = arith.constant 0 : index
    %c6 = arith.constant 6 : index
    %48 = vector.load %arg12[%c0_23, %c6] : memref<48x26xf32, #tpu.memory_space<vmem>>, vector<48x16xf32>
    %49 = vector.broadcast %24 : vector<1x16xf32> to vector<48x16xf32>
    %50 = arith.mulf %48, %49 : vector<48x16xf32>
    %c240 = arith.constant 240 : index
    %c0_24 = arith.constant 0 : index
    %51 = vector.load %arg14[%c240, %c0_24] : memref<432x16xf32, #tpu.memory_space<vmem>>, vector<48x16xf32>
    tpu.vector_store %arg14[%c240, %c0_24], %50 {strides = array<i32>} : memref<432x16xf32, #tpu.memory_space<vmem>>, vector<48x16xf32>,
    %c0_25 = arith.constant 0 : index
    %c8 = arith.constant 8 : index
    %52 = vector.load %arg12[%c0_25, %c8] : memref<48x26xf32, #tpu.memory_space<vmem>>, vector<48x16xf32>
    %53 = vector.broadcast %20 : vector<1x16xf32> to vector<48x16xf32>
    %54 = arith.mulf %52, %53 : vector<48x16xf32>
    %c288 = arith.constant 288 : index
    %c0_26 = arith.constant 0 : index
    %55 = vector.load %arg14[%c288, %c0_26] : memref<432x16xf32, #tpu.memory_space<vmem>>, vector<48x16xf32>
    tpu.vector_store %arg14[%c288, %c0_26], %54 {strides = array<i32>} : memref<432x16xf32, #tpu.memory_space<vmem>>, vector<48x16xf32>,
    %c0_27 = arith.constant 0 : index
    %c9 = arith.constant 9 : index
    %56 = vector.load %arg12[%c0_27, %c9] : memref<48x26xf32, #tpu.memory_space<vmem>>, vector<48x16xf32>
    %c336 = arith.constant 336 : index
    %c0_28 = arith.constant 0 : index
    %57 = vector.load %arg14[%c336, %c0_28] : memref<432x16xf32, #tpu.memory_space<vmem>>, vector<48x16xf32>
    tpu.vector_store %arg14[%c336, %c0_28], %56 {strides = array<i32>} : memref<432x16xf32, #tpu.memory_space<vmem>>, vector<48x16xf32>,
    %c0_29 = arith.constant 0 : index
    %c10 = arith.constant 10 : index
    %58 = vector.load %arg12[%c0_29, %c10] : memref<48x26xf32, #tpu.memory_space<vmem>>, vector<48x16xf32>
    %59 = vector.broadcast %24 : vector<1x16xf32> to vector<48x16xf32>
    %60 = arith.mulf %58, %59 : vector<48x16xf32>
    %c384 = arith.constant 384 : index
    %c0_30 = arith.constant 0 : index
    %61 = vector.load %arg14[%c384, %c0_30] : memref<432x16xf32, #tpu.memory_space<vmem>>, vector<48x16xf32>
    tpu.vector_store %arg14[%c384, %c0_30], %60 {strides = array<i32>} : memref<432x16xf32, #tpu.memory_space<vmem>>, vector<48x16xf32>,
    %c0_31 = arith.constant 0 : index
    %c0_32 = arith.constant 0 : index
    %c0_33 = arith.constant 0 : index
    %62 = vector.load %arg4[%c0_31, %c0_32, %c0_33] : memref<1x8x432xf32, #tpu.memory_space<vmem>>, vector<1x8x432xf32>
    %63 = vector.shape_cast %62 : vector<1x8x432xf32> to vector<8x432xf32>
    %c0_34 = arith.constant 0 : index
    %c0_35 = arith.constant 0 : index
    %64 = vector.load %arg14[%c0_34, %c0_35] : memref<432x16xf32, #tpu.memory_space<vmem>>, vector<432x16xf32>
    %cst_36 = arith.constant dense<0.000000e+00> : vector<8x16xf32>
    %65 = tpu.matmul %63, %64, %cst_36 {dimension_numbers = #tpu.dot_dimension_numbers<[1], [0], [0], [1], [0, 0, 1, 1], [], []>} : vector<8x432xf32>, vector<432x16xf32>, vector<8x16xf32> -> vector<8x16xf32>
    %c0_37 = arith.constant 0 : index
    %c0_38 = arith.constant 0 : index
    %c0_39 = arith.constant 0 : index
    %66 = vector.load %arg5[%c0_37, %c0_38, %c0_39] : memref<1x8x1xf32, #tpu.memory_space<vmem>>, vector<1x8x1xf32>
    %67 = vector.shape_cast %66 : vector<1x8x1xf32> to vector<8x1xf32>
    %68 = vector.broadcast %67 : vector<8x1xf32> to vector<8x16xf32>
    %69 = arith.addf %65, %68 : vector<8x16xf32>
    %c0_40 = arith.constant 0 : index
    %c0_41 = arith.constant 0 : index
    %70 = vector.load %arg10[%c0_40, %c0_41] : memref<8x16xf32, #tpu.memory_space<vmem>>, vector<8x16xf32>
    %71 = arith.addf %70, %69 : vector<8x16xf32>
    %cst_42 = arith.constant 0.000000e+00 : f32
    %72 = vector.broadcast %cst_42 : f32 to vector<8x26xf32>
    %c0_43 = arith.constant 0 : index
    %c0_44 = arith.constant 0 : index
    %73 = vector.load %arg13[%c0_43, %c0_44] : memref<8x26xf32, #tpu.memory_space<vmem>>, vector<8x26xf32>
    tpu.vector_store %arg13[%c0_43, %c0_44], %72 {strides = array<i32>} : memref<8x26xf32, #tpu.memory_space<vmem>>, vector<8x26xf32>,
    %c0_45 = arith.constant 0 : index
    %c5_46 = arith.constant 5 : index
    %74 = vector.load %arg13[%c0_45, %c5_46] : memref<8x26xf32, #tpu.memory_space<vmem>>, vector<8x16xf32>
    tpu.vector_store %arg13[%c0_45, %c5_46], %71 {strides = array<i32>} : memref<8x26xf32, #tpu.memory_space<vmem>>, vector<8x16xf32>,
    %c0_47 = arith.constant 0 : index
    %c0_48 = arith.constant 0 : index
    %75 = vector.load %arg13[%c0_47, %c0_48] : memref<8x26xf32, #tpu.memory_space<vmem>>, vector<8x16xf32>
    %76 = vector.broadcast %20 : vector<1x16xf32> to vector<8x16xf32>
    %77 = arith.mulf %75, %76 : vector<8x16xf32>
    %c0_49 = arith.constant 0 : index
    %c0_50 = arith.constant 0 : index
    %78 = vector.load %arg15[%c0_49, %c0_50] : memref<72x16xf32, #tpu.memory_space<vmem>>, vector<8x16xf32>
    tpu.vector_store %arg15[%c0_49, %c0_50], %77 {strides = array<i32>} : memref<72x16xf32, #tpu.memory_space<vmem>>, vector<8x16xf32>,
    %c0_51 = arith.constant 0 : index
    %c1_52 = arith.constant 1 : index
    %79 = vector.load %arg13[%c0_51, %c1_52] : memref<8x26xf32, #tpu.memory_space<vmem>>, vector<8x16xf32>
    %c8_53 = arith.constant 8 : index
    %c0_54 = arith.constant 0 : index
    %80 = vector.load %arg15[%c8_53, %c0_54] : memref<72x16xf32, #tpu.memory_space<vmem>>, vector<8x16xf32>
    tpu.vector_store %arg15[%c8_53, %c0_54], %79 {strides = array<i32>} : memref<72x16xf32, #tpu.memory_space<vmem>>, vector<8x16xf32>,
    %c0_55 = arith.constant 0 : index
    %c2_56 = arith.constant 2 : index
    %81 = vector.load %arg13[%c0_55, %c2_56] : memref<8x26xf32, #tpu.memory_space<vmem>>, vector<8x16xf32>
    %82 = vector.broadcast %24 : vector<1x16xf32> to vector<8x16xf32>
    %83 = arith.mulf %81, %82 : vector<8x16xf32>
    %c16 = arith.constant 16 : index
    %c0_57 = arith.constant 0 : index
    %84 = vector.load %arg15[%c16, %c0_57] : memref<72x16xf32, #tpu.memory_space<vmem>>, vector<8x16xf32>
    tpu.vector_store %arg15[%c16, %c0_57], %83 {strides = array<i32>} : memref<72x16xf32, #tpu.memory_space<vmem>>, vector<8x16xf32>,
    %c0_58 = arith.constant 0 : index
    %c4_59 = arith.constant 4 : index
    %85 = vector.load %arg13[%c0_58, %c4_59] : memref<8x26xf32, #tpu.memory_space<vmem>>, vector<8x16xf32>
    %86 = vector.broadcast %20 : vector<1x16xf32> to vector<8x16xf32>
    %87 = arith.mulf %85, %86 : vector<8x16xf32>
    %c24 = arith.constant 24 : index
    %c0_60 = arith.constant 0 : index
    %88 = vector.load %arg15[%c24, %c0_60] : memref<72x16xf32, #tpu.memory_space<vmem>>, vector<8x16xf32>
    tpu.vector_store %arg15[%c24, %c0_60], %87 {strides = array<i32>} : memref<72x16xf32, #tpu.memory_space<vmem>>, vector<8x16xf32>,
    %c0_61 = arith.constant 0 : index
    %c5_62 = arith.constant 5 : index
    %89 = vector.load %arg13[%c0_61, %c5_62] : memref<8x26xf32, #tpu.memory_space<vmem>>, vector<8x16xf32>
    %c32 = arith.constant 32 : index
    %c0_63 = arith.constant 0 : index
    %90 = vector.load %arg15[%c32, %c0_63] : memref<72x16xf32, #tpu.memory_space<vmem>>, vector<8x16xf32>
    tpu.vector_store %arg15[%c32, %c0_63], %89 {strides = array<i32>} : memref<72x16xf32, #tpu.memory_space<vmem>>, vector<8x16xf32>,
    %c0_64 = arith.constant 0 : index
    %c6_65 = arith.constant 6 : index
    %91 = vector.load %arg13[%c0_64, %c6_65] : memref<8x26xf32, #tpu.memory_space<vmem>>, vector<8x16xf32>
    %92 = vector.broadcast %24 : vector<1x16xf32> to vector<8x16xf32>
    %93 = arith.mulf %91, %92 : vector<8x16xf32>
    %c40 = arith.constant 40 : index
    %c0_66 = arith.constant 0 : index
    %94 = vector.load %arg15[%c40, %c0_66] : memref<72x16xf32, #tpu.memory_space<vmem>>, vector<8x16xf32>
    tpu.vector_store %arg15[%c40, %c0_66], %93 {strides = array<i32>} : memref<72x16xf32, #tpu.memory_space<vmem>>, vector<8x16xf32>,
    %c0_67 = arith.constant 0 : index
    %c8_68 = arith.constant 8 : index
    %95 = vector.load %arg13[%c0_67, %c8_68] : memref<8x26xf32, #tpu.memory_space<vmem>>, vector<8x16xf32>
    %96 = vector.broadcast %20 : vector<1x16xf32> to vector<8x16xf32>
    %97 = arith.mulf %95, %96 : vector<8x16xf32>
    %c48_69 = arith.constant 48 : index
    %c0_70 = arith.constant 0 : index
    %98 = vector.load %arg15[%c48_69, %c0_70] : memref<72x16xf32, #tpu.memory_space<vmem>>, vector<8x16xf32>
    tpu.vector_store %arg15[%c48_69, %c0_70], %97 {strides = array<i32>} : memref<72x16xf32, #tpu.memory_space<vmem>>, vector<8x16xf32>,
    %c0_71 = arith.constant 0 : index
    %c9_72 = arith.constant 9 : index
    %99 = vector.load %arg13[%c0_71, %c9_72] : memref<8x26xf32, #tpu.memory_space<vmem>>, vector<8x16xf32>
    %c56 = arith.constant 56 : index
    %c0_73 = arith.constant 0 : index
    %100 = vector.load %arg15[%c56, %c0_73] : memref<72x16xf32, #tpu.memory_space<vmem>>, vector<8x16xf32>
    tpu.vector_store %arg15[%c56, %c0_73], %99 {strides = array<i32>} : memref<72x16xf32, #tpu.memory_space<vmem>>, vector<8x16xf32>,
    %c0_74 = arith.constant 0 : index
    %c10_75 = arith.constant 10 : index
    %101 = vector.load %arg13[%c0_74, %c10_75] : memref<8x26xf32, #tpu.memory_space<vmem>>, vector<8x16xf32>
    %102 = vector.broadcast %24 : vector<1x16xf32> to vector<8x16xf32>
    %103 = arith.mulf %101, %102 : vector<8x16xf32>
    %c64 = arith.constant 64 : index
    %c0_76 = arith.constant 0 : index
    %104 = vector.load %arg15[%c64, %c0_76] : memref<72x16xf32, #tpu.memory_space<vmem>>, vector<8x16xf32>
    tpu.vector_store %arg15[%c64, %c0_76], %103 {strides = array<i32>} : memref<72x16xf32, #tpu.memory_space<vmem>>, vector<8x16xf32>,
    %c0_77 = arith.constant 0 : index
    %c0_78 = arith.constant 0 : index
    %c0_79 = arith.constant 0 : index
    %105 = vector.load %arg6[%c0_77, %c0_78, %c0_79] : memref<1x96x72xf32, #tpu.memory_space<vmem>>, vector<1x96x72xf32>
    %106 = vector.shape_cast %105 : vector<1x96x72xf32> to vector<96x72xf32>
    %c0_80 = arith.constant 0 : index
    %c0_81 = arith.constant 0 : index
    %107 = vector.load %arg15[%c0_80, %c0_81] : memref<72x16xf32, #tpu.memory_space<vmem>>, vector<72x16xf32>
    %cst_82 = arith.constant dense<0.000000e+00> : vector<96x16xf32>
    %108 = tpu.matmul %106, %107, %cst_82 {dimension_numbers = #tpu.dot_dimension_numbers<[1], [0], [0], [1], [0, 0, 1, 1], [], []>} : vector<96x72xf32>, vector<72x16xf32>, vector<96x16xf32> -> vector<96x16xf32>
    %c0_83 = arith.constant 0 : index
    %c0_84 = arith.constant 0 : index
    %c0_85 = arith.constant 0 : index
    %109 = vector.load %arg7[%c0_83, %c0_84, %c0_85] : memref<1x96x1xf32, #tpu.memory_space<vmem>>, vector<1x96x1xf32>
    %110 = vector.shape_cast %109 : vector<1x96x1xf32> to vector<96x1xf32>
    %111 = vector.broadcast %110 : vector<96x1xf32> to vector<96x16xf32>
    %112 = arith.addf %108, %111 : vector<96x16xf32>
    %113 = vector.extract_strided_slice %112 {offsets = [0, 0], sizes = [48, 16], strides = [1, 1]} : vector<96x16xf32> to vector<48x16xf32>
    %114 = arith.negf %113 : vector<48x16xf32>
    %115 = math.exp %114 : vector<48x16xf32>
    %cst_86 = arith.constant 1.000000e+00 : f32
    %116 = vector.broadcast %cst_86 : f32 to vector<48x16xf32>
    %117 = arith.addf %116, %115 : vector<48x16xf32>
    %118 = arith.divf %116, %117 : vector<48x16xf32>
    %cst_87 = arith.constant 2.000000e+00 : f32
    %119 = vector.broadcast %cst_87 : f32 to vector<48x16xf32>
    %120 = arith.mulf %118, %119 : vector<48x16xf32>
    %cst_88 = arith.constant 1.000000e+00 : f32
    %121 = vector.broadcast %cst_88 : f32 to vector<48x16xf32>
    %122 = arith.subf %120, %121 : vector<48x16xf32>
    %cst_89 = arith.constant 1.000000e+00 : f32
    %123 = vector.broadcast %cst_89 : f32 to vector<48x16xf32>
    %124 = arith.mulf %123, %122 : vector<48x16xf32>
    %125 = math.exp %124 : vector<48x16xf32>
    %126 = arith.mulf %28, %125 : vector<48x16xf32>
    %127 = vector.extract_strided_slice %112 {offsets = [48, 0], sizes = [48, 16], strides = [1, 1]} : vector<96x16xf32> to vector<48x16xf32>
    %128 = arith.addf %126, %127 : vector<48x16xf32>
    %c0_90 = arith.constant 0 : index
    %c0_91 = arith.constant 0 : index
    %129 = vector.load %arg10[%c0_90, %c0_91] : memref<8x16xf32, #tpu.memory_space<vmem>>, vector<8x16xf32>
    tpu.vector_store %arg10[%c0_90, %c0_91], %71 {strides = array<i32>} : memref<8x16xf32, #tpu.memory_space<vmem>>, vector<8x16xf32>,
    %c0_92 = arith.constant 0 : index
    %c0_93 = arith.constant 0 : index
    %130 = vector.load %arg11[%c0_92, %c0_93] : memref<48x16xf32, #tpu.memory_space<vmem>>, vector<48x16xf32>
    tpu.vector_store %arg11[%c0_92, %c0_93], %128 {strides = array<i32>} : memref<48x16xf32, #tpu.memory_space<vmem>>, vector<48x16xf32>,
    %c0_94 = arith.constant 0 : index
    %c0_95 = arith.constant 0 : index
    %c0_96 = arith.constant 0 : index
    %131 = vector.load %arg8[%c0_94, %c0_95, %c0_96] : memref<1x8x16xf32, #tpu.memory_space<vmem>>, vector<1x8x16xf32>
    %132 = vector.shape_cast %131 : vector<1x8x16xf32> to vector<8x16xf32>
    %133 = vector.shape_cast %71 : vector<8x16xf32> to vector<1x8x16xf32>
    tpu.vector_store %arg8[%c0_94, %c0_95, %c0_96], %133 {strides = array<i32>} : memref<1x8x16xf32, #tpu.memory_space<vmem>>, vector<1x8x16xf32>,
    %c0_97 = arith.constant 0 : index
    %c0_98 = arith.constant 0 : index
    %c0_99 = arith.constant 0 : index
    %134 = vector.load %arg9[%c0_97, %c0_98, %c0_99] : memref<1x48x16xf32, #tpu.memory_space<vmem>>, vector<1x48x16xf32>
    %135 = vector.shape_cast %134 : vector<1x48x16xf32> to vector<48x16xf32>
    %136 = vector.shape_cast %128 : vector<48x16xf32> to vector<1x48x16xf32>
    tpu.vector_store %arg9[%c0_97, %c0_98, %c0_99], %136 {strides = array<i32>} : memref<1x48x16xf32, #tpu.memory_space<vmem>>, vector<1x48x16xf32>,
    return
  }
  func.func @transform_0(%arg0: i32, %arg1: i32) -> (i32, i32, i32) {
    %c0_i32 = arith.constant 0 : i32
    %c0_i32_0 = arith.constant 0 : i32
    %c0_i32_1 = arith.constant 0 : i32
    return %arg0, %c0_i32, %c0_i32_0 : i32, i32, i32
  }
  func.func @transform_1(%arg0: i32, %arg1: i32) -> (i32, i32, i32) {
    %c0_i32 = arith.constant 0 : i32
    %c0_i32_0 = arith.constant 0 : i32
    %c0_i32_1 = arith.constant 0 : i32
    return %arg0, %c0_i32, %c0_i32_0 : i32, i32, i32
  }
  func.func @transform_2(%arg0: i32, %arg1: i32) -> (i32, i32, i32) {
    %c0_i32 = arith.constant 0 : i32
    %c0_i32_0 = arith.constant 0 : i32
    %c0_i32_1 = arith.constant 0 : i32
    return %arg1, %c0_i32, %c0_i32_0 : i32, i32, i32
  }
  func.func @transform_3(%arg0: i32, %arg1: i32) -> (i32, i32, i32) {
    %c0_i32 = arith.constant 0 : i32
    %c0_i32_0 = arith.constant 0 : i32
    %c0_i32_1 = arith.constant 0 : i32
    return %arg1, %c0_i32, %c0_i32_0 : i32, i32, i32
  }
  func.func @transform_4(%arg0: i32, %arg1: i32) -> (i32, i32, i32) {
    %c0_i32 = arith.constant 0 : i32
    %c0_i32_0 = arith.constant 0 : i32
    %c0_i32_1 = arith.constant 0 : i32
    return %arg1, %c0_i32, %c0_i32_0 : i32, i32, i32
  }
  func.func @transform_5(%arg0: i32, %arg1: i32) -> (i32, i32, i32) {
    %c0_i32 = arith.constant 0 : i32
    %c0_i32_0 = arith.constant 0 : i32
    %c0_i32_1 = arith.constant 0 : i32
    return %arg1, %c0_i32, %c0_i32_0 : i32, i32, i32
  }
  func.func @transform_6(%arg0: i32, %arg1: i32) -> (i32, i32, i32) {
    %c0_i32 = arith.constant 0 : i32
    %c0_i32_0 = arith.constant 0 : i32
    %c0_i32_1 = arith.constant 0 : i32
    return %arg0, %c0_i32, %c0_i32_0 : i32, i32, i32
  }
  func.func @transform_7(%arg0: i32, %arg1: i32) -> (i32, i32, i32) {
    %c0_i32 = arith.constant 0 : i32
    %c0_i32_0 = arith.constant 0 : i32
    %c0_i32_1 = arith.constant 0 : i32
    return %arg0, %c0_i32, %c0_i32_0 : i32, i32, i32
  }
}

</mosaic_0001>

<llo_original>
// kernel: selfc_invnet_forward.2
$region0: #{selfc_invnet_forward.2}
  #allocation0 [shape = 'u32[]', space=smem, size = 0x4, offset = 0x4, fixed_abs, tag = 'smem constant byte address 0x4 - core index']
  #allocation1 [shape = 'u32[144,128]{1,0:T(1,128)}', space=vmem, size = 0x12000, scoped, tag = 'internal scratch']
  %s0 = inlined_call_operand.vmem [shape: f32[2,48,16], index: 0, kind: input, shape index: {}]
  %s1 = inlined_call_operand.vmem [shape: f32[16,4], index: 1, kind: input, shape index: {}]
  %s2 = inlined_call_operand.vmem [shape: f32[12,48], index: 2, kind: input, shape index: {}]
  %s3 = inlined_call_operand.vmem [shape: f32[48,12], index: 3, kind: input, shape index: {}]
  %s4 = inlined_call_operand.vmem [shape: f32[4,16], index: 4, kind: input, shape index: {}]
  %s5 = inlined_call_operand.vmem [shape: f32[2,12,4], index: 5, kind: output, shape index: {0}]
  %s6 = inlined_call_operand.vmem [shape: f32[2,48,16], index: 6, kind: output, shape index: {1}]
  %7 = xla_tuple %s5, %s6
  %s8 = sld [smem:[#allocation0]]
  $region61: #{selfc_invnet_forward.2} parent=0
    _
  %s10 = ssub.s32 1, %s8
  %s11 = scalar_select 0, %s10, %s8
  loop: start=0, step=1, limit=4
  $region2: #{selfc_invnet_forward.2} parent=0 // loop_pre_header
    _
  $region3: #{selfc_invnet_forward.2} parent=0 // loop_header
    %s13 = sphi 0, %s17
    %p14 = scmp.ge.s32.totalorder %s13, 4
    %s23 = sphi 0, %s25
    %s26 = sphi 0, %s23
    %s27 = sphi 0, %s26
    %s43 = sphi 0, %s27
    %s47 = sphi 0, %s47
    %s49 = sphi 0, %s47
    %s50 = sphi 0, %s49
    %s64 = sphi 0, %s50
    %s68 = sphi 0, %s68
    %s70 = sphi 0, %s68
    %s71 = sphi 0, %s70
    %s85 = sphi 0, %s71
    %s89 = sphi 0, %s89
    %s91 = sphi 0, %s89
    %s92 = sphi 0, %s91
    %s106 = sphi 0, %s92
    %s110 = sphi 0, %s110
    %s112 = sphi 0, %s110
    %s113 = sphi 0, %s112
    %s127 = sphi 0, %s113
    %s133 = sphi 0, %s135
    %s136 = sphi 0, %s133
    %s137 = sphi 0, %s136
    %s153 = sphi 0, %s137
    %s159 = sphi 0, %s161
    %s162 = sphi 0, %s159
    %s163 = sphi 0, %s162
    %s179 = sphi 0, %s163
  $region4: #{selfc_invnet_forward.2} parent=0 // loop_header_branch
    %16 = sbr.rel (%p14) target = $region8
  $region5: #{selfc_invnet_forward.2} parent=0 // loop_body
    %s18 = ssub.s32 %s13, 1
    %s19 = ssub.s32 %s13, 2
    %s20 = sadd.s32 %s13, 1
    %s21 = ssub.s32 %s13, %s20
    %p22 = scmp.eq.s32.totalorder %s21, 0
    %s24 = sadd.s32 %s23, 1
    %s25 = scalar_select %p22, %s23, %s24
    %p28 = pneg %p22
    %p29 = scmp.eq.s32.totalorder %s13, 1
    %p30 = por %p28, %p29
    %p31 = scmp.ne.s32.totalorder %s23, %s26
    %p32 = scmp.eq.s32.totalorder %s13, 0
    %p33 = por %p31, %p32
    %p34 = scmp.ne.s32.totalorder %s23, %s26
    %p35 = scmp.eq.s32.totalorder %s18, 1
    %p36 = por %p34, %p35
    %p37 = scmp.ne.s32.totalorder %s26, %s27
    %p38 = scmp.eq.s32.totalorder %s18, 0
    %p39 = por %p37, %p38
    %p40 = scmp.ne.s32.totalorder %s26, %s27
    %p41 = scmp.eq.s32.totalorder %s19, 1
    %p42 = por %p40, %p41
    %p44 = scmp.ne.s32.totalorder %s27, %s43
    %p45 = scmp.eq.s32.totalorder %s19, 0
    %p46 = por %p44, %p45
    %s48 = sadd.s32 %s47, 1
    %p51 = scmp.eq.s32.totalorder %s13, 1
    %p52 = scmp.ne.s32.totalorder %s47, %s49
    %p53 = scmp.eq.s32.totalorder %s13, 0
    %p54 = por %p52, %p53
    %p55 = scmp.ne.s32.totalorder %s47, %s49
    %p56 = scmp.eq.s32.totalorder %s18, 1
    %p57 = por %p55, %p56
    %p58 = scmp.ne.s32.totalorder %s49, %s50
    %p59 = scmp.eq.s32.totalorder %s18, 0
    %p60 = por %p58, %p59
    %p61 = scmp.ne.s32.totalorder %s49, %s50
    %p62 = scmp.eq.s32.totalorder %s19, 1
    %p63 = por %p61, %p62
    %p65 = scmp.ne.s32.totalorder %s50, %s64
    %p66 = scmp.eq.s32.totalorder %s19, 0
    %p67 = por %p65, %p66
    %s69 = sadd.s32 %s68, 1
    %p72 = scmp.eq.s32.totalorder %s13, 1
    %p73 = scmp.ne.s32.totalorder %s68, %s70
    %p74 = scmp.eq.s32.totalorder %s13, 0
    %p75 = por %p73, %p74
    %p76 = scmp.ne.s32.totalorder %s68, %s70
    %p77 = scmp.eq.s32.totalorder %s18, 1
    %p78 = por %p76, %p77
    %p79 = scmp.ne.s32.totalorder %s70, %s71
    %p80 = scmp.eq.s32.totalorder %s18, 0
    %p81 = por %p79, %p80
    %p82 = scmp.ne.s32.totalorder %s70, %s71
    %p83 = scmp.eq.s32.totalorder %s19, 1
    %p84 = por %p82, %p83
    %p86 = scmp.ne.s32.totalorder %s71, %s85
    %p87 = scmp.eq.s32.totalorder %s19, 0
    %p88 = por %p86, %p87
    %s90 = sadd.s32 %s89, 1
    %p93 = scmp.eq.s32.totalorder %s13, 1
    %p94 = scmp.ne.s32.totalorder %s89, %s91
    %p95 = scmp.eq.s32.totalorder %s13, 0
    %p96 = por %p94, %p95
    %p97 = scmp.ne.s32.totalorder %s89, %s91
    %p98 = scmp.eq.s32.totalorder %s18, 1
    %p99 = por %p97, %p98
    %p100 = scmp.ne.s32.totalorder %s91, %s92
    %p101 = scmp.eq.s32.totalorder %s18, 0
    %p102 = por %p100, %p101
    %p103 = scmp.ne.s32.totalorder %s91, %s92
    %p104 = scmp.eq.s32.totalorder %s19, 1
    %p105 = por %p103, %p104
    %p107 = scmp.ne.s32.totalorder %s92, %s106
    %p108 = scmp.eq.s32.totalorder %s19, 0
    %p109 = por %p107, %p108
    %s111 = sadd.s32 %s110, 1
    %p114 = scmp.eq.s32.totalorder %s13, 1
    %p115 = scmp.ne.s32.totalorder %s110, %s112
    %p116 = scmp.eq.s32.totalorder %s13, 0
    %p117 = por %p115, %p116
    %p118 = scmp.ne.s32.totalorder %s110, %s112
    %p119 = scmp.eq.s32.totalorder %s18, 1
    %p120 = por %p118, %p119
    %p121 = scmp.ne.s32.totalorder %s112, %s113
    %p122 = scmp.eq.s32.totalorder %s18, 0
    %p123 = por %p121, %p122
    %p124 = scmp.ne.s32.totalorder %s112, %s113
    %p125 = scmp.eq.s32.totalorder %s19, 1
    %p126 = por %p124, %p125
    %p128 = scmp.ne.s32.totalorder %s113, %s127
    %p129 = scmp.eq.s32.totalorder %s19, 0
    %p130 = por %p128, %p129
    %s131 = ssub.s32 %s13, %s20
    %p132 = scmp.eq.s32.totalorder %s131, 0
    %s134 = sadd.s32 %s133, 1
    %s135 = scalar_select %p132, %s133, %s134
    %p138 = pneg %p132
    %p139 = scmp.eq.s32.totalorder %s13, 1
    %p140 = por %p138, %p139
    %p141 = scmp.ne.s32.totalorder %s133, %s136
    %p142 = scmp.eq.s32.totalorder %s13, 0
    %p143 = por %p141, %p142
    %p144 = scmp.ne.s32.totalorder %s133, %s136
    %p145 = scmp.eq.s32.totalorder %s18, 1
    %p146 = por %p144, %p145
    %p147 = scmp.ne.s32.totalorder %s136, %s137
    %p148 = scmp.eq.s32.totalorder %s18, 0
    %p149 = por %p147, %p148
    %p150 = scmp.ne.s32.totalorder %s136, %s137
    %p151 = scmp.eq.s32.totalorder %s19, 1
    %p152 = por %p150, %p151
    %p154 = scmp.ne.s32.totalorder %s137, %s153
    %p155 = scmp.eq.s32.totalorder %s19, 0
    %p156 = por %p154, %p155
    %s157 = ssub.s32 %s13, %s20
    %p158 = scmp.eq.s32.totalorder %s157, 0
    %s160 = sadd.s32 %s159, 1
    %s161 = scalar_select %p158, %s159, %s160
    %p164 = pneg %p158
    %p165 = scmp.eq.s32.totalorder %s13, 1
    %p166 = por %p164, %p165
    %p167 = scmp.ne.s32.totalorder %s159, %s162
    %p168 = scmp.eq.s32.totalorder %s13, 0
    %p169 = por %p167, %p168
    %p170 = scmp.ne.s32.totalorder %s159, %s162
    %p171 = scmp.eq.s32.totalorder %s18, 1
    %p172 = por %p170, %p171
    %p173 = scmp.ne.s32.totalorder %s162, %s163
    %p174 = scmp.eq.s32.totalorder %s18, 0
    %p175 = por %p173, %p174
    %p176 = scmp.ne.s32.totalorder %s162, %s163
    %p177 = scmp.eq.s32.totalorder %s19, 1
    %p178 = por %p176, %p177
    %p180 = scmp.ne.s32.totalorder %s163, %s179
    %p181 = scmp.eq.s32.totalorder %s19, 0
    %p182 = por %p180, %p181
    %p183 = scmp.le.s32.totalorder 1, %s13
    %p184 = scmp.lt.s32.totalorder %s13, 3
    %p185 = pnand %p183, %p184
    %p186 = pneg %p185
    // Predicated region
    $region9: #{selfc_invnet_forward.2} parent=5 // pred_check
      _
    $region10: #{selfc_invnet_forward.2} parent=5 // pred_check_branch
      %188 = sbr.rel (%p185) target = $region12
    $region11: #{selfc_invnet_forward.2} parent=5 // pred_region
      %s189 = ssub.s32 %s13, 1
      // Predicated region
      $region13: #{selfc_invnet_forward.2} parent=11 // pred_check
        %p190 = pneg %p60
      $region14: #{selfc_invnet_forward.2} parent=11 // pred_check_branch
        %192 = sbr.rel (%p190) target = $region16
      $region15: #{selfc_invnet_forward.2} parent=11 // pred_region
        _
      $region16: #{selfc_invnet_forward.2} parent=11 // pred_fallthru
        _
      // Predicated region
      $region17: #{selfc_invnet_forward.2} parent=11 // pred_check
        %p193 = pneg %p81
      $region18: #{selfc_invnet_forward.2} parent=11 // pred_check_branch
        %195 = sbr.rel (%p193) target = $region20
      $region19: #{selfc_invnet_forward.2} parent=11 // pred_region
        _
      $region20: #{selfc_invnet_forward.2} parent=11 // pred_fallthru
        _
      // Predicated region
      $region21: #{selfc_invnet_forward.2} parent=11 // pred_check
        %p196 = pneg %p102
      $region22: #{selfc_invnet_forward.2} parent=11 // pred_check_branch
        %198 = sbr.rel (%p196) target = $region24
      $region23: #{selfc_invnet_forward.2} parent=11 // pred_region
        _
      $region24: #{selfc_invnet_forward.2} parent=11 // pred_fallthru
        _
      // Predicated region
      $region25: #{selfc_invnet_forward.2} parent=11 // pred_check
        %p199 = pneg %p123
      $region26: #{selfc_invnet_forward.2} parent=11 // pred_check_branch
        %201 = sbr.rel (%p199) target = $region28
      $region27: #{selfc_invnet_forward.2} parent=11 // pred_region
        _
      $region28: #{selfc_invnet_forward.2} parent=11 // pred_fallthru
        _
    $region12: #{selfc_invnet_forward.2} parent=5 // pred_fallthru
      _
    %p202 = scmp.lt.s32.totalorder %s13, 2
    // Predicated region
    $region29: #{selfc_invnet_forward.2} parent=5 // pred_check
      %p203 = pneg %p202
    $region30: #{selfc_invnet_forward.2} parent=5 // pred_check_branch
      %205 = sbr.rel (%p203) target = $region32
    $region31: #{selfc_invnet_forward.2} parent=5 // pred_region
      // Predicated region
      $region33: #{selfc_invnet_forward.2} parent=31 // pred_check
        %p206 = pneg %p33
      $region34: #{selfc_invnet_forward.2} parent=31 // pred_check_branch
        %208 = sbr.rel (%p206) target = $region36
      $region35: #{selfc_invnet_forward.2} parent=31 // pred_region
        %p209 = scmp.lt.s32.totalorder %s13, 1
        %s210 = scalar_select %p209, %s13, 1
        %s211 = smul.addr %s210, 6
        %s212 = smul.addr %s211, 8
        %s213 = scalar_lea.vmem %s0, %s212
      $region36: #{selfc_invnet_forward.2} parent=31 // pred_fallthru
        _
    $region32: #{selfc_invnet_forward.2} parent=5 // pred_fallthru
      _
    %p214 = scmp.le.s32.totalorder 1, %s13
    %p215 = scmp.lt.s32.totalorder %s13, 3
    %p216 = pnand %p214, %p215
    %p217 = pneg %p216
    // Predicated region
    $region37: #{selfc_invnet_forward.2} parent=5 // pred_check
      _
    $region38: #{selfc_invnet_forward.2} parent=5 // pred_check_branch
      %219 = sbr.rel (%p216) target = $region40
    $region39: #{selfc_invnet_forward.2} parent=5 // pred_region
      %s220 = ssub.s32 %s13, 1
      %p221 = scmp.lt.s32.totalorder %s18, 1
      %s222 = scalar_select %p221, %s18, 1
      %s223 = smul.addr %s222, 6
      %s224 = smul.addr %s223, 8
      %s225 = scalar_lea.vmem %s0, %s224
      %p226 = pneg %p39
      %p227 = pneg %p36
      %p228 = pneg %p60
      %p229 = pneg %p57
      %p230 = pneg %p81
      %p231 = pneg %p78
      %p232 = pneg %p102
      %p233 = pneg %p99
      %p234 = pneg %p123
      %p235 = pneg %p120
      %p236 = pneg %p149
      %p237 = pneg %p146
      %p238 = scmp.lt.s32.totalorder %s18, 1
      %s239 = scalar_select %p238, %s18, 1
      %s240 = smul.addr %s239, 2
      %s241 = smul.addr %s240, 8
      %s242 = scalar_lea.vmem %s5, %s241
      %p243 = pneg %p175
      %p244 = pneg %p172
      %p245 = scmp.lt.s32.totalorder %s18, 1
      %s246 = scalar_select %p245, %s18, 1
      %s247 = smul.addr %s246, 6
      %s248 = smul.addr %s247, 8
      %s249 = scalar_lea.vmem %s6, %s248
      %p250 = scmp.lt.s32.totalorder %s18, 1
      %s251 = scalar_select %p250, %s18, 1
      %s252 = smul.addr %s251, 6
      %s253 = smul.addr %s252, 8
      %s254 = scalar_lea.vmem %s0, %s253
      %p255 = scmp.lt.s32.totalorder %s18, 1
      %s256 = scalar_select %p255, %s18, 1
      %s257 = smul.addr %s256, 2
      %s258 = smul.addr %s257, 8
      %s259 = scalar_lea.vmem %s5, %s258
      %p260 = scmp.lt.s32.totalorder %s18, 1
      %s261 = scalar_select %p260, %s18, 1
      %s262 = smul.addr %s261, 6
      %s263 = smul.addr %s262, 8
      %s264 = scalar_lea.vmem %s6, %s263
      %v265 = vld [vmem:[%s254] sm:$0xff]
      %v266 = vld [vmem:[%s254 + $0x8] sm:$0xff]
      %v267 = vld [vmem:[%s254 + $0x10] sm:$0xff]
      %v268 = vld [vmem:[%s254 + $0x18] sm:$0xff]
      %v269 = vld [vmem:[%s254 + $0x20] sm:$0xff]
      %v270 = vld [vmem:[%s254 + $0x28] sm:$0xff]
      %v271 = vld [vmem:[%s1] sm:$0xff]
      %v272 = vld [vmem:[%s1 + $0x8] sm:$0xff]
      %vm273 = vcmask 130048
      %v275 = vsel %vm273, %v265, 0
      %v278 = vsel %vm273, %v266, 0
      %v281 = vsel %vm273, %v267, 0
      %v284 = vsel %vm273, %v268, 0
      %v287 = vsel %vm273, %v269, 0
      %v290 = vsel %vm273, %v270, 0
      %292 = vmatprep.subr.mxu0 0.0
      %293 = vmatpush1.msra.mxu0 %v271
      %294 = vmatprep.subr.mxu0 0.0
      %295 = vmatpush1.msra.mxu0 %v272
      %296 = vmatprep.subr.mxu0 0.0
      %297 = vmatpush1.msra.mxu0 0.0
      %298 = vmatprep.subr.mxu0 0.0
      %299 = vmatpush1.msra.mxu0 0.0
      %300 = vmatprep.subr.mxu0 0.0
      %301 = vmatpush1.msra.mxu0 0.0
      %302 = vmatprep.subr.mxu0 0.0
      %303 = vmatpush1.msra.mxu0 0.0
      %304 = vmatprep.subr.mxu0 0.0
      %305 = vmatpush1.msra.mxu0 0.0
      %306 = vmatprep.subr.mxu0 0.0
      %307 = vmatpush1.msra.mxu0 0.0
      %308 = vmatprep.subr.mxu0 0.0
      %309 = vmatpush1.msra.mxu0 0.0
      %310 = vmatprep.subr.mxu0 0.0
      %311 = vmatpush1.msra.mxu0 0.0
      %312 = vmatprep.subr.mxu0 0.0
      %313 = vmatpush1.msra.mxu0 0.0
      %314 = vmatprep.subr.mxu0 0.0
      %315 = vmatpush1.msra.mxu0 0.0
      %316 = vmatprep.subr.mxu0 0.0
      %317 = vmatpush1.msra.mxu0 0.0
      %318 = vmatprep.subr.mxu0 0.0
      %319 = vmatpush1.msra.mxu0 0.0
      %320 = vmatprep.subr.mxu0 0.0
      %321 = vmatpush1.msra.mxu0 0.0
      %322 = vmatprep.subr.mxu0 0.0
      %323 = vmatpush1.msra.mxu0 0.0
      %324 = vmatprep.subr.mxu0 0.0
      %325 = vmatpush1.msra.mxu0 0.0
      %326 = vmatprep.subr.mxu0 0.0
      %327 = vmatpush1.msra.mxu0 0.0
      %328 = vmatprep.subr.mxu0 0.0
      %329 = vmatpush1.msra.mxu0 0.0
      %330 = vmatprep.subr.mxu0 0.0
      %331 = vmatpush1.msra.mxu0 0.0
      %332 = vmatprep.subr.mxu0 0.0
      %333 = vmatpush1.msra.mxu0 0.0
      %334 = vmatprep.subr.mxu0 0.0
      %335 = vmatpush1.msra.mxu0 0.0
      %336 = vmatprep.subr.mxu0 0.0
      %337 = vmatpush1.msra.mxu0 0.0
      %338 = vmatprep.subr.mxu0 0.0
      %339 = vmatpush1.msra.mxu0 0.0
      %340 = vmatprep.subr.mxu0 0.0
      %341 = vmatpush1.msra.mxu0 0.0
      %342 = vmatprep.subr.mxu0 0.0
      %343 = vmatpush1.msra.mxu0 0.0
      %344 = vmatprep.subr.mxu0 0.0
      %345 = vmatpush1.msra.mxu0 0.0
      %346 = vmatprep.subr.mxu0 0.0
      %347 = vmatpush1.msra.mxu0 0.0
      %348 = vmatprep.subr.mxu0 0.0
      %349 = vmatpush1.msra.mxu0 0.0
      %350 = vmatprep.subr.mxu0 0.0
      %351 = vmatpush1.msra.mxu0 0.0
      %352 = vmatprep.subr.mxu0 0.0
      %353 = vmatpush1.msra.mxu0 0.0
      %354 = vmatprep.subr.mxu0 0.0
      %355 = vmatpush1.msra.mxu0 0.0
      %356 = vmatprep.mubr.f32.mxu0 0.0
      %357 = vmatmul.mubr.f32.gmra.mrb[0].mxu0 %v275
      %v358 = vpop.f32.mrb[0].mxu0
      %v359 = vadd.f32 0.0, %v358
      %v360 = vpop.f32.mrb[0].mxu0
      %361 = vmatprep.mubr.f32.mxu0 0.0
      %362 = vmatmul.mubr.f32.gmra.mrb[0].mxu0 %v278
      %v363 = vpop.f32.mrb[0].mxu0
      %v364 = vadd.f32 0.0, %v363
      %v365 = vpop.f32.mrb[0].mxu0
      %366 = vmatprep.mubr.f32.mxu0 0.0
      %367 = vmatmul.mubr.f32.gmra.mrb[0].mxu0 %v281
      %v368 = vpop.f32.mrb[0].mxu0
      %v369 = vadd.f32 0.0, %v368
      %v370 = vpop.f32.mrb[0].mxu0
      %371 = vmatprep.mubr.f32.mxu0 0.0
      %372 = vmatmul.mubr.f32.gmra.mrb[0].mxu0 %v284
      %v373 = vpop.f32.mrb[0].mxu0
      %v374 = vadd.f32 0.0, %v373
      %v375 = vpop.f32.mrb[0].mxu0
      %376 = vmatprep.mubr.f32.mxu0 0.0
      %377 = vmatmul.mubr.f32.gmra.mrb[0].mxu0 %v287
      %v378 = vpop.f32.mrb[0].mxu0
      %v379 = vadd.f32 0.0, %v378
      %v380 = vpop.f32.mrb[0].mxu0
      %381 = vmatprep.mubr.f32.mxu0 0.0
      %382 = vmatmul.mubr.f32.gmra.mrb[0].mxu0 %v290
      %v383 = vpop.f32.mrb[0].mxu0
      %v384 = vadd.f32 0.0, %v383
      %v385 = vpop.f32.mrb[0].mxu0
      %386 = vdwg.mxu0
      %v387 = vld [vmem:[%s2] sm:$0xff]
      %v388 = vld [vmem:[%s2 + $0x8] sm:$0xf]
      %vm389 = vcmask 392192
      %v391 = vsel %vm389, %v387, 0
      %v394 = vsel %vm389, %v388, 0
      %396 = vmatprep.subr.mxu0 0.0
      %397 = vmatpush1.msra.mxu0 %v359
      %398 = vmatprep.subr.mxu0 0.0
      %399 = vmatpush1.msra.mxu0 %v364
      %400 = vmatprep.subr.mxu0 0.0
      %401 = vmatpush1.msra.mxu0 %v369
      %402 = vmatprep.subr.mxu0 0.0
      %403 = vmatpush1.msra.mxu0 %v374
      %404 = vmatprep.subr.mxu0 0.0
      %405 = vmatpush1.msra.mxu0 %v379
      %406 = vmatprep.subr.mxu0 0.0
      %407 = vmatpush1.msra.mxu0 %v384
      %408 = vmatprep.subr.mxu0 0.0
      %409 = vmatpush1.msra.mxu0 0.0
      %410 = vmatprep.subr.mxu0 0.0
      %411 = vmatpush1.msra.mxu0 0.0
      %412 = vmatprep.subr.mxu0 0.0
      %413 = vmatpush1.msra.mxu0 0.0
      %414 = vmatprep.subr.mxu0 0.0
      %415 = vmatpush1.msra.mxu0 0.0
      %416 = vmatprep.subr.mxu0 0.0
      %417 = vmatpush1.msra.mxu0 0.0
      %418 = vmatprep.subr.mxu0 0.0
      %419 = vmatpush1.msra.mxu0 0.0
      %420 = vmatprep.subr.mxu0 0.0
      %421 = vmatpush1.msra.mxu0 0.0
      %422 = vmatprep.subr.mxu0 0.0
      %423 = vmatpush1.msra.mxu0 0.0
      %424 = vmatprep.subr.mxu0 0.0
      %425 = vmatpush1.msra.mxu0 0.0
      %426 = vmatprep.subr.mxu0 0.0
      %427 = vmatpush1.msra.mxu0 0.0
      %428 = vmatprep.subr.mxu0 0.0
      %429 = vmatpush1.msra.mxu0 0.0
      %430 = vmatprep.subr.mxu0 0.0
      %431 = vmatpush1.msra.mxu0 0.0
      %432 = vmatprep.subr.mxu0 0.0
      %433 = vmatpush1.msra.mxu0 0.0
      %434 = vmatprep.subr.mxu0 0.0
      %435 = vmatpush1.msra.mxu0 0.0
      %436 = vmatprep.subr.mxu0 0.0
      %437 = vmatpush1.msra.mxu0 0.0
      %438 = vmatprep.subr.mxu0 0.0
      %439 = vmatpush1.msra.mxu0 0.0
      %440 = vmatprep.subr.mxu0 0.0
      %441 = vmatpush1.msra.mxu0 0.0
      %442 = vmatprep.subr.mxu0 0.0
      %443 = vmatpush1.msra.mxu0 0.0
      %444 = vmatprep.subr.mxu0 0.0
      %445 = vmatpush1.msra.mxu0 0.0
      %446 = vmatprep.subr.mxu0 0.0
      %447 = vmatpush1.msra.mxu0 0.0
      %448 = vmatprep.subr.mxu0 0.0
      %449 = vmatpush1.msra.mxu0 0.0
      %450 = vmatprep.subr.mxu0 0.0
      %451 = vmatpush1.msra.mxu0 0.0
      %452 = vmatprep.subr.mxu0 0.0
      %453 = vmatpush1.msra.mxu0 0.0
      %454 = vmatprep.subr.mxu0 0.0
      %455 = vmatpush1.msra.mxu0 0.0
      %456 = vmatprep.subr.mxu0 0.0
      %457 = vmatpush1.msra.mxu0 0.0
      %458 = vmatprep.subr.mxu0 0.0
      %459 = vmatpush1.msra.mxu0 0.0
      %460 = vmatprep.mubr.f32.mxu0 0.0
      %461 = vmatmul.mubr.f32.gmra.mrb[0].mxu0 %v391
      %v462 = vpop.f32.mrb[0].mxu0
      %v463 = vadd.f32 0.0, %v462
      %v464 = vpop.f32.mrb[0].mxu0
      %465 = vmatprep.mubr.f32.mxu0 0.0
      %466 = vmatmul.mubr.f32.gmra.mrb[0].mxu0 %v394
      %v467 = vpop.f32.mrb[0].mxu0
      %v468 = vadd.f32 0.0, %v467
      %v469 = vpop.f32.mrb[0].mxu0
      %470 = vdwg.mxu0
      %v471 = vld [vmem:[%s3] sm:$0xff]
      %v472 = vld [vmem:[%s3 + $0x8] sm:$0xff]
      %v473 = vld [vmem:[%s3 + $0x10] sm:$0xff]
      %v474 = vld [vmem:[%s3 + $0x18] sm:$0xff]
      %v475 = vld [vmem:[%s3 + $0x20] sm:$0xff]
      %v476 = vld [vmem:[%s3 + $0x28] sm:$0xff]
      %v477 = vld [vmem:[%s4] sm:$0xf]
      %vm478 = vcmask 31744
      %v480 = vsel %vm478, %v463, 0
      %v483 = vsel %vm478, %v468, 0
      %vm485 = vcmask 1043456
      %v487 = vsel %vm485, %v477, 0
      %489 = vmatprep.subr.mxu0 0.0
      %490 = vmatpush1.msra.mxu0 %v487
      %491 = vmatprep.subr.mxu0 0.0
      %492 = vmatpush1.msra.mxu0 0.0
      %493 = vmatprep.subr.mxu0 0.0
      %494 = vmatpush1.msra.mxu0 0.0
      %495 = vmatprep.subr.mxu0 0.0
      %496 = vmatpush1.msra.mxu0 0.0
      %497 = vmatprep.subr.mxu0 0.0
      %498 = vmatpush1.msra.mxu0 0.0
      %499 = vmatprep.subr.mxu0 0.0
      %500 = vmatpush1.msra.mxu0 0.0
      %501 = vmatprep.subr.mxu0 0.0
      %502 = vmatpush1.msra.mxu0 0.0
      %503 = vmatprep.subr.mxu0 0.0
      %504 = vmatpush1.msra.mxu0 0.0
      %505 = vmatprep.subr.mxu0 0.0
      %506 = vmatpush1.msra.mxu0 0.0
      %507 = vmatprep.subr.mxu0 0.0
      %508 = vmatpush1.msra.mxu0 0.0
      %509 = vmatprep.subr.mxu0 0.0
      %510 = vmatpush1.msra.mxu0 0.0
      %511 = vmatprep.subr.mxu0 0.0
      %512 = vmatpush1.msra.mxu0 0.0
      %513 = vmatprep.subr.mxu0 0.0
      %514 = vmatpush1.msra.mxu0 0.0
      %515 = vmatprep.subr.mxu0 0.0
      %516 = vmatpush1.msra.mxu0 0.0
      %517 = vmatprep.subr.mxu0 0.0
      %518 = vmatpush1.msra.mxu0 0.0
      %519 = vmatprep.subr.mxu0 0.0
      %520 = vmatpush1.msra.mxu0 0.0
      %521 = vmatprep.subr.mxu0 0.0
      %522 = vmatpush1.msra.mxu0 0.0
      %523 = vmatprep.subr.mxu0 0.0
      %524 = vmatpush1.msra.mxu0 0.0
      %525 = vmatprep.subr.mxu0 0.0
      %526 = vmatpush1.msra.mxu0 0.0
      %527 = vmatprep.subr.mxu0 0.0
      %528 = vmatpush1.msra.mxu0 0.0
      %529 = vmatprep.subr.mxu0 0.0
      %530 = vmatpush1.msra.mxu0 0.0
      %531 = vmatprep.subr.mxu0 0.0
      %532 = vmatpush1.msra.mxu0 0.0
      %533 = vmatprep.subr.mxu0 0.0
      %534 = vmatpush1.msra.mxu0 0.0
      %535 = vmatprep.subr.mxu0 0.0
      %536 = vmatpush1.msra.mxu0 0.0
      %537 = vmatprep.subr.mxu0 0.0
      %538 = vmatpush1.msra.mxu0 0.0
      %539 = vmatprep.subr.mxu0 0.0
      %540 = vmatpush1.msra.mxu0 0.0
      %541 = vmatprep.subr.mxu0 0.0
      %542 = vmatpush1.msra.mxu0 0.0
      %543 = vmatprep.subr.mxu0 0.0
      %544 = vmatpush1.msra.mxu0 0.0
      %545 = vmatprep.subr.mxu0 0.0
      %546 = vmatpush1.msra.mxu0 0.0
      %547 = vmatprep.subr.mxu0 0.0
      %548 = vmatpush1.msra.mxu0 0.0
      %549 = vmatprep.subr.mxu0 0.0
      %550 = vmatpush1.msra.mxu0 0.0
      %551 = vmatprep.subr.mxu0 0.0
      %552 = vmatpush1.msra.mxu0 0.0
      %553 = vmatprep.mubr.f32.mxu0 0.0
      %554 = vmatmul.mubr.f32.gmra.mrb[0].mxu0 %v480
      %v555 = vpop.f32.mrb[0].mxu0
      %v556 = vadd.f32 0.0, %v555
      %v557 = vpop.f32.mrb[0].mxu0
      %558 = vmatprep.mubr.f32.mxu0 0.0
      %559 = vmatmul.mubr.f32.gmra.mrb[0].mxu0 %v483
      %v560 = vpop.f32.mrb[0].mxu0
      %v561 = vadd.f32 0.0, %v560
      %v562 = vpop.f32.mrb[0].mxu0
      %563 = vdwg.mxu0
      %vm564 = vcmask 97280
      %v566 = vsel %vm564, %v471, 0
      %v569 = vsel %vm564, %v472, 0
      %v572 = vsel %vm564, %v473, 0
      %v575 = vsel %vm564, %v474, 0
      %v578 = vsel %vm564, %v475, 0
      %v581 = vsel %vm564, %v476, 0
      %v584 = vsel %vm485, %v561, 0
      %586 = vmatprep.subr.mxu0 0.0
      %587 = vmatpush1.msra.mxu0 %v556
      %588 = vmatprep.subr.mxu0 0.0
      %589 = vmatpush1.msra.mxu0 %v584
      %590 = vmatprep.subr.mxu0 0.0
      %591 = vmatpush1.msra.mxu0 0.0
      %592 = vmatprep.subr.mxu0 0.0
      %593 = vmatpush1.msra.mxu0 0.0
      %594 = vmatprep.subr.mxu0 0.0
      %595 = vmatpush1.msra.mxu0 0.0
      %596 = vmatprep.subr.mxu0 0.0
      %597 = vmatpush1.msra.mxu0 0.0
      %598 = vmatprep.subr.mxu0 0.0
      %599 = vmatpush1.msra.mxu0 0.0
      %600 = vmatprep.subr.mxu0 0.0
      %601 = vmatpush1.msra.mxu0 0.0
      %602 = vmatprep.subr.mxu0 0.0
      %603 = vmatpush1.msra.mxu0 0.0
      %604 = vmatprep.subr.mxu0 0.0
      %605 = vmatpush1.msra.mxu0 0.0
      %606 = vmatprep.subr.mxu0 0.0
      %607 = vmatpush1.msra.mxu0 0.0
      %608 = vmatprep.subr.mxu0 0.0
      %609 = vmatpush1.msra.mxu0 0.0
      %610 = vmatprep.subr.mxu0 0.0
      %611 = vmatpush1.msra.mxu0 0.0
      %612 = vmatprep.subr.mxu0 0.0
      %613 = vmatpush1.msra.mxu0 0.0
      %614 = vmatprep.subr.mxu0 0.0
      %615 = vmatpush1.msra.mxu0 0.0
      %616 = vmatprep.subr.mxu0 0.0
      %617 = vmatpush1.msra.mxu0 0.0
      %618 = vmatprep.subr.mxu0 0.0
      %619 = vmatpush1.msra.mxu0 0.0
      %620 = vmatprep.subr.mxu0 0.0
      %621 = vmatpush1.msra.mxu0 0.0
      %622 = vmatprep.subr.mxu0 0.0
      %623 = vmatpush1.msra.mxu0 0.0
      %624 = vmatprep.subr.mxu0 0.0
      %625 = vmatpush1.msra.mxu0 0.0
      %626 = vmatprep.subr.mxu0 0.0
      %627 = vmatpush1.msra.mxu0 0.0
      %628 = vmatprep.subr.mxu0 0.0
      %629 = vmatpush1.msra.mxu0 0.0
      %630 = vmatprep.subr.mxu0 0.0
      %631 = vmatpush1.msra.mxu0 0.0
      %632 = vmatprep.subr.mxu0 0.0
      %633 = vmatpush1.msra.mxu0 0.0
      %634 = vmatprep.subr.mxu0 0.0
      %635 = vmatpush1.msra.mxu0 0.0
      %636 = vmatprep.subr.mxu0 0.0
      %637 = vmatpush1.msra.mxu0 0.0
      %638 = vmatprep.subr.mxu0 0.0
      %639 = vmatpush1.msra.mxu0 0.0
      %640 = vmatprep.subr.mxu0 0.0
      %641 = vmatpush1.msra.mxu0 0.0
      %642 = vmatprep.subr.mxu0 0.0
      %643 = vmatpush1.msra.mxu0 0.0
      %644 = vmatprep.subr.mxu0 0.0
      %645 = vmatpush1.msra.mxu0 0.0
      %646 = vmatprep.subr.mxu0 0.0
      %647 = vmatpush1.msra.mxu0 0.0
      %648 = vmatprep.subr.mxu0 0.0
      %649 = vmatpush1.msra.mxu0 0.0
      %650 = vmatprep.mubr.f32.mxu0 0.0
      %651 = vmatmul.mubr.f32.gmra.mrb[0].mxu0 %v566
      %v652 = vpop.f32.mrb[0].mxu0
      %v653 = vadd.f32 0.0, %v652
      %v654 = vpop.f32.mrb[0].mxu0
      %655 = vmatprep.mubr.f32.mxu0 0.0
      %656 = vmatmul.mubr.f32.gmra.mrb[0].mxu0 %v569
      %v657 = vpop.f32.mrb[0].mxu0
      %v658 = vadd.f32 0.0, %v657
      %v659 = vpop.f32.mrb[0].mxu0
      %660 = vmatprep.mubr.f32.mxu0 0.0
      %661 = vmatmul.mubr.f32.gmra.mrb[0].mxu0 %v572
      %v662 = vpop.f32.mrb[0].mxu0
      %v663 = vadd.f32 0.0, %v662
      %v664 = vpop.f32.mrb[0].mxu0
      %665 = vmatprep.mubr.f32.mxu0 0.0
      %666 = vmatmul.mubr.f32.gmra.mrb[0].mxu0 %v575
      %v667 = vpop.f32.mrb[0].mxu0
      %v668 = vadd.f32 0.0, %v667
      %v669 = vpop.f32.mrb[0].mxu0
      %670 = vmatprep.mubr.f32.mxu0 0.0
      %671 = vmatmul.mubr.f32.gmra.mrb[0].mxu0 %v578
      %v672 = vpop.f32.mrb[0].mxu0
      %v673 = vadd.f32 0.0, %v672
      %v674 = vpop.f32.mrb[0].mxu0
      %675 = vmatprep.mubr.f32.mxu0 0.0
      %676 = vmatmul.mubr.f32.gmra.mrb[0].mxu0 %v581
      %v677 = vpop.f32.mrb[0].mxu0
      %v678 = vadd.f32 0.0, %v677
      %v679 = vpop.f32.mrb[0].mxu0
      %680 = vdwg.mxu0
      %681 = vst.msk [vmem:[%s259] sm:$0xff] %vm478, %v463
      %vm682 = vcmask 27648
      %683 = vst.msk [vmem:[%s259 + $0x8] sm:$0xf] %vm682, %v468
      %v684 = vsub.f32 %v265, %v653
      %v685 = vsub.f32 %v266, %v658
      %v686 = vsub.f32 %v267, %v663
      %v687 = vsub.f32 %v268, %v668
      %v688 = vsub.f32 %v269, %v673
      %v689 = vsub.f32 %v270, %v678
      %690 = vst.msk [vmem:[%s264] sm:$0xff] %vm273, %v684
      %691 = vst.msk [vmem:[%s264 + $0x8] sm:$0xff] %vm273, %v685
      %692 = vst.msk [vmem:[%s264 + $0x10] sm:$0xff] %vm273, %v686
      %693 = vst.msk [vmem:[%s264 + $0x18] sm:$0xff] %vm273, %v687
      %694 = vst.msk [vmem:[%s264 + $0x20] sm:$0xff] %vm273, %v688
      %695 = vst.msk [vmem:[%s264 + $0x28] sm:$0xff] %vm273, %v689
      %p696 = scmp.lt.s32.totalorder %s18, 1
      %s697 = scalar_select %p696, %s18, 1
      %s698 = smul.addr %s697, 2
      %s699 = smul.addr %s698, 8
      %s700 = scalar_lea.vmem %s5, %s699
      %p701 = scmp.lt.s32.totalorder %s18, 1
      %s702 = scalar_select %p701, %s18, 1
      %s703 = smul.addr %s702, 6
      %s704 = smul.addr %s703, 8
      %s705 = scalar_lea.vmem %s6, %s704
      // Predicated region
      $region41: #{selfc_invnet_forward.2} parent=39 // pred_check
        %p706 = pneg %p146
      $region42: #{selfc_invnet_forward.2} parent=39 // pred_check_branch
        %708 = sbr.rel (%p706) target = $region44
      $region43: #{selfc_invnet_forward.2} parent=39 // pred_region
        _
      $region44: #{selfc_invnet_forward.2} parent=39 // pred_fallthru
        _
      // Predicated region
      $region45: #{selfc_invnet_forward.2} parent=39 // pred_check
        %p709 = pneg %p172
      $region46: #{selfc_invnet_forward.2} parent=39 // pred_check_branch
        %711 = sbr.rel (%p709) target = $region48
      $region47: #{selfc_invnet_forward.2} parent=39 // pred_region
        _
      $region48: #{selfc_invnet_forward.2} parent=39 // pred_fallthru
        _
    $region40: #{selfc_invnet_forward.2} parent=5 // pred_fallthru
      _
    %p712 = scmp.le.s32.totalorder 2, %s13
    // Predicated region
    $region49: #{selfc_invnet_forward.2} parent=5 // pred_check
      %p713 = pneg %p712
    $region50: #{selfc_invnet_forward.2} parent=5 // pred_check_branch
      %715 = sbr.rel (%p713) target = $region52
    $region51: #{selfc_invnet_forward.2} parent=5 // pred_region
      %s716 = ssub.s32 %s13, 2
      // Predicated region
      $region53: #{selfc_invnet_forward.2} parent=51 // pred_check
        %p717 = pneg %p152
      $region54: #{selfc_invnet_forward.2} parent=51 // pred_check_branch
        %719 = sbr.rel (%p717) target = $region56
      $region55: #{selfc_invnet_forward.2} parent=51 // pred_region
        %p720 = scmp.lt.s32.totalorder %s19, 1
        %s721 = scalar_select %p720, %s19, 1
        %s722 = smul.addr %s721, 2
        %s723 = smul.addr %s722, 8
        %s724 = scalar_lea.vmem %s5, %s723
      $region56: #{selfc_invnet_forward.2} parent=51 // pred_fallthru
        _
      // Predicated region
      $region57: #{selfc_invnet_forward.2} parent=51 // pred_check
        %p725 = pneg %p178
      $region58: #{selfc_invnet_forward.2} parent=51 // pred_check_branch
        %727 = sbr.rel (%p725) target = $region60
      $region59: #{selfc_invnet_forward.2} parent=51 // pred_region
        %p728 = scmp.lt.s32.totalorder %s19, 1
        %s729 = scalar_select %p728, %s19, 1
        %s730 = smul.addr %s729, 6
        %s731 = smul.addr %s730, 8
        %s732 = scalar_lea.vmem %s6, %s731
      $region60: #{selfc_invnet_forward.2} parent=51 // pred_fallthru
        _
    $region52: #{selfc_invnet_forward.2} parent=5 // pred_fallthru
      _
  $region6: #{selfc_invnet_forward.2} parent=0 // loop_footer
    %s17 = sadd.s32 1, %s13
  $region7: #{selfc_invnet_forward.2} parent=0 // loop_footer_branch
    %12 = sbr.rel target = $region3
  $region8: #{selfc_invnet_forward.2} parent=0 // loop_exit
    _

// kernel: selfc_invnet_forward.3
$region0: #{selfc_invnet_forward.3}
  #allocation0 [shape = 'u32[]', space=smem, size = 0x4, offset = 0x4, fixed_abs, tag = 'smem constant byte address 0x4 - core index']
  #allocation1 [shape = 'u32[144,128]{1,0:T(1,128)}', space=vmem, size = 0x12000, scoped, tag = 'internal scratch']
  #allocation2 [shape = 'f32[8,16]{1,0:T(8,128)}', space=vmem, size = 0x1000, scoped, tag = 'scratch operand']
  #allocation3 [shape = 'f32[48,16]{1,0:T(8,128)}', space=vmem, size = 0x6000, scoped, tag = 'scratch operand']
  #allocation4 [shape = 'f32[48,26]{1,0:T(8,128)}', space=vmem, size = 0x6000, scoped, tag = 'scratch operand']
  #allocation5 [shape = 'f32[8,26]{1,0:T(8,128)}', space=vmem, size = 0x1000, scoped, tag = 'scratch operand']
  #allocation6 [shape = 'f32[432,16]{1,0:T(8,128)}', space=vmem, size = 0x36000, scoped, tag = 'scratch operand']
  #allocation7 [shape = 'f32[72,16]{1,0:T(8,128)}', space=vmem, size = 0x9000, scoped, tag = 'scratch operand']
  %s0 = inlined_call_operand.vmem [shape: f32[2,8,16], index: 0, kind: input, shape index: {}]
  %s1 = inlined_call_operand.vmem [shape: f32[2,48,16], index: 1, kind: input, shape index: {}]
  %s2 = inlined_call_operand.vmem [shape: f32[2,8,432], index: 2, kind: input, shape index: {}]
  %s3 = inlined_call_operand.vmem [shape: f32[2,8,1], index: 3, kind: input, shape index: {}]
  %s4 = inlined_call_operand.vmem [shape: f32[2,96,72], index: 4, kind: input, shape index: {}]
  %s5 = inlined_call_operand.vmem [shape: f32[2,96,1], index: 5, kind: input, shape index: {}]
  %s6 = inlined_call_operand.vmem [shape: f32[2,8,16], index: 6, kind: output, shape index: {0}]
  %s7 = inlined_call_operand.vmem [shape: f32[2,48,16], index: 7, kind: output, shape index: {1}]
  %8 = xla_tuple %s6, %s7
  %s9 = sld [smem:[#allocation0]]
  $region69: #{selfc_invnet_forward.3} parent=0
    _
  %s11 = ssub.s32 1, %s9
  %s12 = scalar_select 0, %s11, %s9
  loop: start=0, step=1, limit=6
  $region2: #{selfc_invnet_forward.3} parent=0 // loop_pre_header
    _
  $region3: #{selfc_invnet_forward.3} parent=0 // loop_header
    %s14 = sphi 0, %s18
    %p15 = scmp.ge.s32.totalorder %s14, 6
    %s21 = sphi 0, %s33
    %s22 = sphi 0, %s29
    %s23 = sphi 0, %s21
    %s24 = sphi 0, %s22
    %s25 = sphi 0, %s23
    %s26 = sphi 0, %s24
    %s36 = sphi 0, %s38
    %s39 = sphi 0, %s36
    %s40 = sphi 0, %s39
    %s56 = sphi 0, %s40
    %s62 = sphi 0, %s64
    %s65 = sphi 0, %s62
    %s66 = sphi 0, %s65
    %s82 = sphi 0, %s66
    %s88 = sphi 0, %s90
    %s91 = sphi 0, %s88
    %s92 = sphi 0, %s91
    %s108 = sphi 0, %s92
    %s114 = sphi 0, %s116
    %s117 = sphi 0, %s114
    %s118 = sphi 0, %s117
    %s134 = sphi 0, %s118
    %s140 = sphi 0, %s142
    %s143 = sphi 0, %s140
    %s144 = sphi 0, %s143
    %s160 = sphi 0, %s144
    %s166 = sphi 0, %s168
    %s169 = sphi 0, %s166
    %s170 = sphi 0, %s169
    %s186 = sphi 0, %s170
    %s192 = sphi 0, %s194
    %s195 = sphi 0, %s192
    %s196 = sphi 0, %s195
    %s212 = sphi 0, %s196
    %s218 = sphi 0, %s220
    %s221 = sphi 0, %s218
    %s222 = sphi 0, %s221
    %s238 = sphi 0, %s222
  $region4: #{selfc_invnet_forward.3} parent=0 // loop_header_branch
    %17 = sbr.rel (%p15) target = $region8
  $region5: #{selfc_invnet_forward.3} parent=0 // loop_body
    %s19 = ssub.s32 %s14, 1
    %s20 = ssub.s32 %s14, 2
    %s27 = sadd.s32 1, %s22
    %p28 = scmp.ge.s32.totalorder %s27, 2
    %s29 = scalar_select %p28, 0, %s27
    %s30 = sadd.s32 1, %s21
    %s31 = scalar_select %p28, %s30, %s21
    %p32 = scmp.ge.s32.totalorder %s31, 2
    %s33 = scalar_select %p32, 0, %s31
    %s34 = ssub.s32 %s21, %s33
    %p35 = scmp.eq.s32.totalorder %s34, 0
    %s37 = sadd.s32 %s36, 1
    %s38 = scalar_select %p35, %s36, %s37
    %p41 = pneg %p35
    %p42 = scmp.eq.s32.totalorder %s14, 3
    %p43 = por %p41, %p42
    %p44 = scmp.ne.s32.totalorder %s36, %s39
    %p45 = scmp.eq.s32.totalorder %s14, 0
    %p46 = por %p44, %p45
    %p47 = scmp.ne.s32.totalorder %s36, %s39
    %p48 = scmp.eq.s32.totalorder %s19, 3
    %p49 = por %p47, %p48
    %p50 = scmp.ne.s32.totalorder %s39, %s40
    %p51 = scmp.eq.s32.totalorder %s19, 0
    %p52 = por %p50, %p51
    %p53 = scmp.ne.s32.totalorder %s39, %s40
    %p54 = scmp.eq.s32.totalorder %s20, 3
    %p55 = por %p53, %p54
    %p57 = scmp.ne.s32.totalorder %s40, %s56
    %p58 = scmp.eq.s32.totalorder %s20, 0
    %p59 = por %p57, %p58
    %s60 = ssub.s32 %s21, %s33
    %p61 = scmp.eq.s32.totalorder %s60, 0
    %s63 = sadd.s32 %s62, 1
    %s64 = scalar_select %p61, %s62, %s63
    %p67 = pneg %p61
    %p68 = scmp.eq.s32.totalorder %s14, 3
    %p69 = por %p67, %p68
    %p70 = scmp.ne.s32.totalorder %s62, %s65
    %p71 = scmp.eq.s32.totalorder %s14, 0
    %p72 = por %p70, %p71
    %p73 = scmp.ne.s32.totalorder %s62, %s65
    %p74 = scmp.eq.s32.totalorder %s19, 3
    %p75 = por %p73, %p74
    %p76 = scmp.ne.s32.totalorder %s65, %s66
    %p77 = scmp.eq.s32.totalorder %s19, 0
    %p78 = por %p76, %p77
    %p79 = scmp.ne.s32.totalorder %s65, %s66
    %p80 = scmp.eq.s32.totalorder %s20, 3
    %p81 = por %p79, %p80
    %p83 = scmp.ne.s32.totalorder %s66, %s82
    %p84 = scmp.eq.s32.totalorder %s20, 0
    %p85 = por %p83, %p84
    %s86 = ssub.s32 %s22, %s29
    %p87 = scmp.eq.s32.totalorder %s86, 0
    %s89 = sadd.s32 %s88, 1
    %s90 = scalar_select %p87, %s88, %s89
    %p93 = pneg %p87
    %p94 = scmp.eq.s32.totalorder %s14, 3
    %p95 = por %p93, %p94
    %p96 = scmp.ne.s32.totalorder %s88, %s91
    %p97 = scmp.eq.s32.totalorder %s14, 0
    %p98 = por %p96, %p97
    %p99 = scmp.ne.s32.totalorder %s88, %s91
    %p100 = scmp.eq.s32.totalorder %s19, 3
    %p101 = por %p99, %p100
    %p102 = scmp.ne.s32.totalorder %s91, %s92
    %p103 = scmp.eq.s32.totalorder %s19, 0
    %p104 = por %p102, %p103
    %p105 = scmp.ne.s32.totalorder %s91, %s92
    %p106 = scmp.eq.s32.totalorder %s20, 3
    %p107 = por %p105, %p106
    %p109 = scmp.ne.s32.totalorder %s92, %s108
    %p110 = scmp.eq.s32.totalorder %s20, 0
    %p111 = por %p109, %p110
    %s112 = ssub.s32 %s22, %s29
    %p113 = scmp.eq.s32.totalorder %s112, 0
    %s115 = sadd.s32 %s114, 1
    %s116 = scalar_select %p113, %s114, %s115
    %p119 = pneg %p113
    %p120 = scmp.eq.s32.totalorder %s14, 3
    %p121 = por %p119, %p120
    %p122 = scmp.ne.s32.totalorder %s114, %s117
    %p123 = scmp.eq.s32.totalorder %s14, 0
    %p124 = por %p122, %p123
    %p125 = scmp.ne.s32.totalorder %s114, %s117
    %p126 = scmp.eq.s32.totalorder %s19, 3
    %p127 = por %p125, %p126
    %p128 = scmp.ne.s32.totalorder %s117, %s118
    %p129 = scmp.eq.s32.totalorder %s19, 0
    %p130 = por %p128, %p129
    %p131 = scmp.ne.s32.totalorder %s117, %s118
    %p132 = scmp.eq.s32.totalorder %s20, 3
    %p133 = por %p131, %p132
    %p135 = scmp.ne.s32.totalorder %s118, %s134
    %p136 = scmp.eq.s32.totalorder %s20, 0
    %p137 = por %p135, %p136
    %s138 = ssub.s32 %s22, %s29
    %p139 = scmp.eq.s32.totalorder %s138, 0
    %s141 = sadd.s32 %s140, 1
    %s142 = scalar_select %p139, %s140, %s141
    %p145 = pneg %p139
    %p146 = scmp.eq.s32.totalorder %s14, 3
    %p147 = por %p145, %p146
    %p148 = scmp.ne.s32.totalorder %s140, %s143
    %p149 = scmp.eq.s32.totalorder %s14, 0
    %p150 = por %p148, %p149
    %p151 = scmp.ne.s32.totalorder %s140, %s143
    %p152 = scmp.eq.s32.totalorder %s19, 3
    %p153 = por %p151, %p152
    %p154 = scmp.ne.s32.totalorder %s143, %s144
    %p155 = scmp.eq.s32.totalorder %s19, 0
    %p156 = por %p154, %p155
    %p157 = scmp.ne.s32.totalorder %s143, %s144
    %p158 = scmp.eq.s32.totalorder %s20, 3
    %p159 = por %p157, %p158
    %p161 = scmp.ne.s32.totalorder %s144, %s160
    %p162 = scmp.eq.s32.totalorder %s20, 0
    %p163 = por %p161, %p162
    %s164 = ssub.s32 %s22, %s29
    %p165 = scmp.eq.s32.totalorder %s164, 0
    %s167 = sadd.s32 %s166, 1
    %s168 = scalar_select %p165, %s166, %s167
    %p171 = pneg %p165
    %p172 = scmp.eq.s32.totalorder %s14, 3
    %p173 = por %p171, %p172
    %p174 = scmp.ne.s32.totalorder %s166, %s169
    %p175 = scmp.eq.s32.totalorder %s14, 0
    %p176 = por %p174, %p175
    %p177 = scmp.ne.s32.totalorder %s166, %s169
    %p178 = scmp.eq.s32.totalorder %s19, 3
    %p179 = por %p177, %p178
    %p180 = scmp.ne.s32.totalorder %s169, %s170
    %p181 = scmp.eq.s32.totalorder %s19, 0
    %p182 = por %p180, %p181
    %p183 = scmp.ne.s32.totalorder %s169, %s170
    %p184 = scmp.eq.s32.totalorder %s20, 3
    %p185 = por %p183, %p184
    %p187 = scmp.ne.s32.totalorder %s170, %s186
    %p188 = scmp.eq.s32.totalorder %s20, 0
    %p189 = por %p187, %p188
    %s190 = ssub.s32 %s21, %s33
    %p191 = scmp.eq.s32.totalorder %s190, 0
    %s193 = sadd.s32 %s192, 1
    %s194 = scalar_select %p191, %s192, %s193
    %p197 = pneg %p191
    %p198 = scmp.eq.s32.totalorder %s14, 3
    %p199 = por %p197, %p198
    %p200 = scmp.ne.s32.totalorder %s192, %s195
    %p201 = scmp.eq.s32.totalorder %s14, 0
    %p202 = por %p200, %p201
    %p203 = scmp.ne.s32.totalorder %s192, %s195
    %p204 = scmp.eq.s32.totalorder %s19, 3
    %p205 = por %p203, %p204
    %p206 = scmp.ne.s32.totalorder %s195, %s196
    %p207 = scmp.eq.s32.totalorder %s19, 0
    %p208 = por %p206, %p207
    %p209 = scmp.ne.s32.totalorder %s195, %s196
    %p210 = scmp.eq.s32.totalorder %s20, 3
    %p211 = por %p209, %p210
    %p213 = scmp.ne.s32.totalorder %s196, %s212
    %p214 = scmp.eq.s32.totalorder %s20, 0
    %p215 = por %p213, %p214
    %s216 = ssub.s32 %s21, %s33
    %p217 = scmp.eq.s32.totalorder %s216, 0
    %s219 = sadd.s32 %s218, 1
    %s220 = scalar_select %p217, %s218, %s219
    %p223 = pneg %p217
    %p224 = scmp.eq.s32.totalorder %s14, 3
    %p225 = por %p223, %p224
    %p226 = scmp.ne.s32.totalorder %s218, %s221
    %p227 = scmp.eq.s32.totalorder %s14, 0
    %p228 = por %p226, %p227
    %p229 = scmp.ne.s32.totalorder %s218, %s221
    %p230 = scmp.eq.s32.totalorder %s19, 3
    %p231 = por %p229, %p230
    %p232 = scmp.ne.s32.totalorder %s221, %s222
    %p233 = scmp.eq.s32.totalorder %s19, 0
    %p234 = por %p232, %p233
    %p235 = scmp.ne.s32.totalorder %s221, %s222
    %p236 = scmp.eq.s32.totalorder %s20, 3
    %p237 = por %p235, %p236
    %p239 = scmp.ne.s32.totalorder %s222, %s238
    %p240 = scmp.eq.s32.totalorder %s20, 0
    %p241 = por %p239, %p240
    %p242 = scmp.le.s32.totalorder 1, %s14
    %p243 = scmp.lt.s32.totalorder %s14, 5
    %p244 = pnand %p242, %p243
    %p245 = pneg %p244
    // Predicated region
    $region9: #{selfc_invnet_forward.3} parent=5 // pred_check
      _
    $region10: #{selfc_invnet_forward.3} parent=5 // pred_check_branch
      %247 = sbr.rel (%p244) target = $region12
    $region11: #{selfc_invnet_forward.3} parent=5 // pred_region
      %s248 = ssub.s32 %s14, 1
    $region12: #{selfc_invnet_forward.3} parent=5 // pred_fallthru
      _
    %p249 = scmp.lt.s32.totalorder %s14, 4
    // Predicated region
    $region13: #{selfc_invnet_forward.3} parent=5 // pred_check
      %p250 = pneg %p249
    $region14: #{selfc_invnet_forward.3} parent=5 // pred_check_branch
      %252 = sbr.rel (%p250) target = $region16
    $region15: #{selfc_invnet_forward.3} parent=5 // pred_region
      // Predicated region
      $region17: #{selfc_invnet_forward.3} parent=15 // pred_check
        %p253 = pneg %p46
      $region18: #{selfc_invnet_forward.3} parent=15 // pred_check_branch
        %255 = sbr.rel (%p253) target = $region20
      $region19: #{selfc_invnet_forward.3} parent=15 // pred_region
        %p256 = scmp.lt.s32.totalorder %s21, 1
        %s257 = scalar_select %p256, %s21, 1
        %s258 = smul.addr %s257, 8
        %s259 = scalar_lea.vmem %s0, %s258
      $region20: #{selfc_invnet_forward.3} parent=15 // pred_fallthru
        _
      // Predicated region
      $region21: #{selfc_invnet_forward.3} parent=15 // pred_check
        %p260 = pneg %p72
      $region22: #{selfc_invnet_forward.3} parent=15 // pred_check_branch
        %262 = sbr.rel (%p260) target = $region24
      $region23: #{selfc_invnet_forward.3} parent=15 // pred_region
        %p263 = scmp.lt.s32.totalorder %s21, 1
        %s264 = scalar_select %p263, %s21, 1
        %s265 = smul.addr %s264, 6
        %s266 = smul.addr %s265, 8
        %s267 = scalar_lea.vmem %s1, %s266
      $region24: #{selfc_invnet_forward.3} parent=15 // pred_fallthru
        _
      // Predicated region
      $region25: #{selfc_invnet_forward.3} parent=15 // pred_check
        %p268 = pneg %p98
      $region26: #{selfc_invnet_forward.3} parent=15 // pred_check_branch
        %270 = sbr.rel (%p268) target = $region28
      $region27: #{selfc_invnet_forward.3} parent=15 // pred_region
        %p271 = scmp.lt.s32.totalorder %s22, 1
        %s272 = scalar_select %p271, %s22, 1
        %s273 = smul.addr %s272, 4
        %s274 = smul.addr %s273, 8
        %s275 = scalar_lea.vmem %s2, %s274
      $region28: #{selfc_invnet_forward.3} parent=15 // pred_fallthru
        _
      // Predicated region
      $region29: #{selfc_invnet_forward.3} parent=15 // pred_check
        %p276 = pneg %p124
      $region30: #{selfc_invnet_forward.3} parent=15 // pred_check_branch
        %278 = sbr.rel (%p276) target = $region32
      $region31: #{selfc_invnet_forward.3} parent=15 // pred_region
        %p279 = scmp.lt.s32.totalorder %s22, 1
        %s280 = scalar_select %p279, %s22, 1
        %s281 = smul.addr %s280, 8
        %s282 = scalar_lea.vmem %s3, %s281
      $region32: #{selfc_invnet_forward.3} parent=15 // pred_fallthru
        _
      // Predicated region
      $region33: #{selfc_invnet_forward.3} parent=15 // pred_check
        %p283 = pneg %p150
      $region34: #{selfc_invnet_forward.3} parent=15 // pred_check_branch
        %285 = sbr.rel (%p283) target = $region36
      $region35: #{selfc_invnet_forward.3} parent=15 // pred_region
        %p286 = scmp.lt.s32.totalorder %s22, 1
        %s287 = scalar_select %p286, %s22, 1
        %s288 = smul.addr %s287, 12
        %s289 = smul.addr %s288, 8
        %s290 = scalar_lea.vmem %s4, %s289
      $region36: #{selfc_invnet_forward.3} parent=15 // pred_fallthru
        _
      // Predicated region
      $region37: #{selfc_invnet_forward.3} parent=15 // pred_check
        %p291 = pneg %p176
      $region38: #{selfc_invnet_forward.3} parent=15 // pred_check_branch
        %293 = sbr.rel (%p291) target = $region40
      $region39: #{selfc_invnet_forward.3} parent=15 // pred_region
        %p294 = scmp.lt.s32.totalorder %s22, 1
        %s295 = scalar_select %p294, %s22, 1
        %s296 = smul.addr %s295, 12
        %s297 = smul.addr %s296, 8
        %s298 = scalar_lea.vmem %s5, %s297
      $region40: #{selfc_invnet_forward.3} parent=15 // pred_fallthru
        _
    $region16: #{selfc_invnet_forward.3} parent=5 // pred_fallthru
      _
    %p299 = scmp.le.s32.totalorder 1, %s14
    %p300 = scmp.lt.s32.totalorder %s14, 5
    %p301 = pnand %p299, %p300
    %p302 = pneg %p301
    // Predicated region
    $region41: #{selfc_invnet_forward.3} parent=5 // pred_check
      _
    $region42: #{selfc_invnet_forward.3} parent=5 // pred_check_branch
      %304 = sbr.rel (%p301) target = $region44
    $region43: #{selfc_invnet_forward.3} parent=5 // pred_region
      %s305 = ssub.s32 %s14, 1
      %p306 = scmp.lt.s32.totalorder %s23, 1
      %s307 = scalar_select %p306, %s23, 1
      %s308 = smul.addr %s307, 8
      %s309 = scalar_lea.vmem %s0, %s308
      %p310 = pneg %p52
      %p311 = pneg %p49
      %p312 = scmp.lt.s32.totalorder %s23, 1
      %s313 = scalar_select %p312, %s23, 1
      %s314 = smul.addr %s313, 6
      %s315 = smul.addr %s314, 8
      %s316 = scalar_lea.vmem %s1, %s315
      %p317 = pneg %p78
      %p318 = pneg %p75
      %p319 = scmp.lt.s32.totalorder %s24, 1
      %s320 = scalar_select %p319, %s24, 1
      %s321 = smul.addr %s320, 4
      %s322 = smul.addr %s321, 8
      %s323 = scalar_lea.vmem %s2, %s322
      %p324 = pneg %p104
      %p325 = pneg %p101
      %p326 = scmp.lt.s32.totalorder %s24, 1
      %s327 = scalar_select %p326, %s24, 1
      %s328 = smul.addr %s327, 8
      %s329 = scalar_lea.vmem %s3, %s328
      %p330 = pneg %p130
      %p331 = pneg %p127
      %p332 = scmp.lt.s32.totalorder %s24, 1
      %s333 = scalar_select %p332, %s24, 1
      %s334 = smul.addr %s333, 12
      %s335 = smul.addr %s334, 8
      %s336 = scalar_lea.vmem %s4, %s335
      %p337 = pneg %p156
      %p338 = pneg %p153
      %p339 = scmp.lt.s32.totalorder %s24, 1
      %s340 = scalar_select %p339, %s24, 1
      %s341 = smul.addr %s340, 12
      %s342 = smul.addr %s341, 8
      %s343 = scalar_lea.vmem %s5, %s342
      %p344 = pneg %p182
      %p345 = pneg %p179
      %p346 = pneg %p208
      %p347 = pneg %p205
      %p348 = scmp.lt.s32.totalorder %s23, 1
      %s349 = scalar_select %p348, %s23, 1
      %s350 = smul.addr %s349, 8
      %s351 = scalar_lea.vmem %s6, %s350
      %p352 = pneg %p234
      %p353 = pneg %p231
      %p354 = scmp.lt.s32.totalorder %s23, 1
      %s355 = scalar_select %p354, %s23, 1
      %s356 = smul.addr %s355, 6
      %s357 = smul.addr %s356, 8
      %s358 = scalar_lea.vmem %s7, %s357
      %p359 = scmp.lt.s32.totalorder %s23, 1
      %s360 = scalar_select %p359, %s23, 1
      %s361 = smul.addr %s360, 8
      %s362 = scalar_lea.vmem %s0, %s361
      %p363 = scmp.lt.s32.totalorder %s23, 1
      %s364 = scalar_select %p363, %s23, 1
      %s365 = smul.addr %s364, 6
      %s366 = smul.addr %s365, 8
      %s367 = scalar_lea.vmem %s1, %s366
      %p368 = scmp.lt.s32.totalorder %s24, 1
      %s369 = scalar_select %p368, %s24, 1
      %s370 = smul.addr %s369, 4
      %s371 = smul.addr %s370, 8
      %s372 = scalar_lea.vmem %s2, %s371
      %p373 = scmp.lt.s32.totalorder %s24, 1
      %s374 = scalar_select %p373, %s24, 1
      %s375 = smul.addr %s374, 8
      %s376 = scalar_lea.vmem %s3, %s375
      %p377 = scmp.lt.s32.totalorder %s24, 1
      %s378 = scalar_select %p377, %s24, 1
      %s379 = smul.addr %s378, 12
      %s380 = smul.addr %s379, 8
      %s381 = scalar_lea.vmem %s4, %s380
      %p382 = scmp.lt.s32.totalorder %s24, 1
      %s383 = scalar_select %p382, %s24, 1
      %s384 = smul.addr %s383, 12
      %s385 = smul.addr %s384, 8
      %s386 = scalar_lea.vmem %s5, %s385
      %p387 = scmp.lt.s32.totalorder %s23, 1
      %s388 = scalar_select %p387, %s23, 1
      %s389 = smul.addr %s388, 8
      %s390 = scalar_lea.vmem %s6, %s389
      %p391 = scmp.lt.s32.totalorder %s23, 1
      %s392 = scalar_select %p391, %s23, 1
      %s393 = smul.addr %s392, 6
      %s394 = smul.addr %s393, 8
      %s395 = scalar_lea.vmem %s7, %s394
      %v396 = vlaneseq
      %v397 = vand.u32 %v396, 127
      %vm398 = vcmp.lt.s32.totalorder %v397, 0
      %v399 = vsub.s32 0, %v397
      %v400 = vsel %vm398, %v399, %v397
      %v401 = vshrl.u32 %v400, 2
      %v402 = vand.u32 %v400, 3
      %v403 = vsub.s32 0, %v402
      %v404 = vsel %vm398, %v403, %v402
      %vm405 = vcmp.ne.s32.totalorder %v404, 0
      %vm406 = vcmp.lt.s32.totalorder %v404, 0
      %vm407 = vmand %vm406, %vm405
      %v408 = vadd.s32 %v404, 4
      %v409 = vsel %vm407, %v408, %v404
      %vm410 = vcmp.ge.s32.totalorder %v409, 1
      %v411 = vsel %vm410, 1, 0
      %v412 = vcvt.s32.f32 %v411
      %vm413 = vcmp.le.s32.totalorder %v409, 2
      %v414 = vsel %vm413, 1, 0
      %v415 = vcvt.s32.f32 %v414
      %p416 = scmp.eq.s32.totalorder %s24, 0
      // Predicated region
      $region45: #{selfc_invnet_forward.3} parent=43 // pred_check
        %p417 = pneg %p416
      $region46: #{selfc_invnet_forward.3} parent=43 // pred_check_branch
        %419 = sbr.rel (%p417) target = $region48
      $region47: #{selfc_invnet_forward.3} parent=43 // pred_region
        %v420 = vld [vmem:[%s362] sm:$0xff]
        %vm421 = vcmask 130048
        %422 = vst.msk [vmem:[#allocation2] sm:$0xff] %vm421, %v420
        %v423 = vld [vmem:[%s367] sm:$0xff]
        %v424 = vld [vmem:[%s367 + $0x8] sm:$0xff]
        %v425 = vld [vmem:[%s367 + $0x10] sm:$0xff]
        %v426 = vld [vmem:[%s367 + $0x18] sm:$0xff]
        %v427 = vld [vmem:[%s367 + $0x20] sm:$0xff]
        %v428 = vld [vmem:[%s367 + $0x28] sm:$0xff]
        %429 = vst.msk [vmem:[#allocation3] sm:$0xff] %vm421, %v423
        %430 = vst.msk [vmem:[#allocation3 + $0x8] sm:$0xff] %vm421, %v424
        %431 = vst.msk [vmem:[#allocation3 + $0x10] sm:$0xff] %vm421, %v425
        %432 = vst.msk [vmem:[#allocation3 + $0x18] sm:$0xff] %vm421, %v426
        %433 = vst.msk [vmem:[#allocation3 + $0x20] sm:$0xff] %vm421, %v427
        %434 = vst.msk [vmem:[#allocation3 + $0x28] sm:$0xff] %vm421, %v428
      $region48: #{selfc_invnet_forward.3} parent=43 // pred_fallthru
        _
      %v435 = vld [vmem:[#allocation3] sm:$0xff]
      %v436 = vld [vmem:[#allocation3 + $0x8] sm:$0xff]
      %v437 = vld [vmem:[#allocation3 + $0x10] sm:$0xff]
      %v438 = vld [vmem:[#allocation3 + $0x18] sm:$0xff]
      %v439 = vld [vmem:[#allocation3 + $0x20] sm:$0xff]
      %v440 = vld [vmem:[#allocation3 + $0x28] sm:$0xff]
      %vm441 = vcmask 211968
      %442 = vst.msk [vmem:[#allocation4] sm:$0xff] %vm441, 0.0
      %443 = vst.msk [vmem:[#allocation4 + $0x8] sm:$0xff] %vm441, 0.0
      %444 = vst.msk [vmem:[#allocation4 + $0x10] sm:$0xff] %vm441, 0.0
      %445 = vst.msk [vmem:[#allocation4 + $0x18] sm:$0xff] %vm441, 0.0
      %446 = vst.msk [vmem:[#allocation4 + $0x20] sm:$0xff] %vm441, 0.0
      %447 = vst.msk [vmem:[#allocation4 + $0x28] sm:$0xff] %vm441, 0.0
      %454 = vrot.lane.b32.xlu0 %v435, 5
      %v455 = vpop.permute.xlu0 %454
      %456 = vrot.lane.b32.xlu0 %v436, 5
      %v457 = vpop.permute.xlu0 %456
      %458 = vrot.lane.b32.xlu0 %v437, 5
      %v459 = vpop.permute.xlu0 %458
      %460 = vrot.lane.b32.xlu0 %v438, 5
      %v461 = vpop.permute.xlu0 %460
      %462 = vrot.lane.b32.xlu0 %v439, 5
      %v463 = vpop.permute.xlu0 %462
      %464 = vrot.lane.b32.xlu0 %v440, 5
      %v465 = vpop.permute.xlu0 %464
      %vm472 = vcmask 171048
      %473 = vst.msk [vmem:[#allocation4] sm:$0xff] %vm472, %v455
      %474 = vst.msk [vmem:[#allocation4 + $0x8] sm:$0xff] %vm472, %v457
      %475 = vst.msk [vmem:[#allocation4 + $0x10] sm:$0xff] %vm472, %v459
      %476 = vst.msk [vmem:[#allocation4 + $0x18] sm:$0xff] %vm472, %v461
      %477 = vst.msk [vmem:[#allocation4 + $0x20] sm:$0xff] %vm472, %v463
      %478 = vst.msk [vmem:[#allocation4 + $0x28] sm:$0xff] %vm472, %v465
      %v479 = vld [vmem:[#allocation4] sm:$0xff]
      %v480 = vld [vmem:[#allocation4 + $0x8] sm:$0xff]
      %v481 = vld [vmem:[#allocation4 + $0x10] sm:$0xff]
      %v482 = vld [vmem:[#allocation4 + $0x18] sm:$0xff]
      %v483 = vld [vmem:[#allocation4 + $0x20] sm:$0xff]
      %v484 = vld [vmem:[#allocation4 + $0x28] sm:$0xff]
      %v485 = vmul.f32 %v479, %v412
      %v486 = vmul.f32 %v480, %v412
      %v487 = vmul.f32 %v481, %v412
      %v488 = vmul.f32 %v482, %v412
      %v489 = vmul.f32 %v483, %v412
      %v490 = vmul.f32 %v484, %v412
      %vm491 = vcmask 130048
      %492 = vst.msk [vmem:[#allocation6] sm:$0xff] %vm491, %v485
      %493 = vst.msk [vmem:[#allocation6 + $0x8] sm:$0xff] %vm491, %v486
      %494 = vst.msk [vmem:[#allocation6 + $0x10] sm:$0xff] %vm491, %v487
      %495 = vst.msk [vmem:[#allocation6 + $0x18] sm:$0xff] %vm491, %v488
      %496 = vst.msk [vmem:[#allocation6 + $0x20] sm:$0xff] %vm491, %v489
      %497 = vst.msk [vmem:[#allocation6 + $0x28] sm:$0xff] %vm491, %v490
      %v498 = vld [vmem:[#allocation4] sm:$0xff]
      %v499 = vld [vmem:[#allocation4 + $0x8] sm:$0xff]
      %v500 = vld [vmem:[#allocation4 + $0x10] sm:$0xff]
      %v501 = vld [vmem:[#allocation4 + $0x18] sm:$0xff]
      %v502 = vld [vmem:[#allocation4 + $0x20] sm:$0xff]
      %v503 = vld [vmem:[#allocation4 + $0x28] sm:$0xff]
      %510 = vrot.lane.b32.xlu0 %v498, 127
      %v511 = vpop.permute.xlu0 %510
      %512 = vrot.lane.b32.xlu0 %v499, 127
      %v513 = vpop.permute.xlu0 %512
      %514 = vrot.lane.b32.xlu0 %v500, 127
      %v515 = vpop.permute.xlu0 %514
      %516 = vrot.lane.b32.xlu0 %v501, 127
      %v517 = vpop.permute.xlu0 %516
      %518 = vrot.lane.b32.xlu0 %v502, 127
      %v519 = vpop.permute.xlu0 %518
      %520 = vrot.lane.b32.xlu0 %v503, 127
      %v521 = vpop.permute.xlu0 %520
      %528 = vst.msk [vmem:[#allocation6 + $0x30] sm:$0xff] %vm491, %v511
      %529 = vst.msk [vmem:[#allocation6 + $0x38] sm:$0xff] %vm491, %v513
      %530 = vst.msk [vmem:[#allocation6 + $0x40] sm:$0xff] %vm491, %v515
      %531 = vst.msk [vmem:[#allocation6 + $0x48] sm:$0xff] %vm491, %v517
      %532 = vst.msk [vmem:[#allocation6 + $0x50] sm:$0xff] %vm491, %v519
      %533 = vst.msk [vmem:[#allocation6 + $0x58] sm:$0xff] %vm491, %v521
      %v534 = vld [vmem:[#allocation4] sm:$0xff]
      %v535 = vld [vmem:[#allocation4 + $0x8] sm:$0xff]
      %v536 = vld [vmem:[#allocation4 + $0x10] sm:$0xff]
      %v537 = vld [vmem:[#allocation4 + $0x18] sm:$0xff]
      %v538 = vld [vmem:[#allocation4 + $0x20] sm:$0xff]
      %v539 = vld [vmem:[#allocation4 + $0x28] sm:$0xff]
      %541 = vrot.lane.b32.xlu0 %v415, 2
      %v542 = vpop.permute.xlu0 %541
      %v544 = vmul.f32 %v534, %v542
      %v545 = vmul.f32 %v535, %v542
      %v546 = vmul.f32 %v536, %v542
      %v547 = vmul.f32 %v537, %v542
      %v548 = vmul.f32 %v538, %v542
      %v549 = vmul.f32 %v539, %v542
      %556 = vrot.lane.b32.xlu0 %v544, 126
      %v557 = vpop.permute.xlu0 %556
      %558 = vrot.lane.b32.xlu0 %v545, 126
      %v559 = vpop.permute.xlu0 %558
      %560 = vrot.lane.b32.xlu0 %v546, 126
      %v561 = vpop.permute.xlu0 %560
      %562 = vrot.lane.b32.xlu0 %v547, 126
      %v563 = vpop.permute.xlu0 %562
      %564 = vrot.lane.b32.xlu0 %v548, 126
      %v565 = vpop.permute.xlu0 %564
      %566 = vrot.lane.b32.xlu0 %v549, 126
      %v567 = vpop.permute.xlu0 %566
      %574 = vst.msk [vmem:[#allocation6 + $0x60] sm:$0xff] %vm491, %v557
      %575 = vst.msk [vmem:[#allocation6 + $0x68] sm:$0xff] %vm491, %v559
      %576 = vst.msk [vmem:[#allocation6 + $0x70] sm:$0xff] %vm491, %v561
      %577 = vst.msk [vmem:[#allocation6 + $0x78] sm:$0xff] %vm491, %v563
      %578 = vst.msk [vmem:[#allocation6 + $0x80] sm:$0xff] %vm491, %v565
      %579 = vst.msk [vmem:[#allocation6 + $0x88] sm:$0xff] %vm491, %v567
      %v580 = vld [vmem:[#allocation4] sm:$0xff]
      %v581 = vld [vmem:[#allocation4 + $0x8] sm:$0xff]
      %v582 = vld [vmem:[#allocation4 + $0x10] sm:$0xff]
      %v583 = vld [vmem:[#allocation4 + $0x18] sm:$0xff]
      %v584 = vld [vmem:[#allocation4 + $0x20] sm:$0xff]
      %v585 = vld [vmem:[#allocation4 + $0x28] sm:$0xff]
      %587 = vrot.lane.b32.xlu0 %v412, 4
      %v588 = vpop.permute.xlu0 %587
      %v590 = vmul.f32 %v580, %v588
      %v591 = vmul.f32 %v581, %v588
      %v592 = vmul.f32 %v582, %v588
      %v593 = vmul.f32 %v583, %v588
      %v594 = vmul.f32 %v584, %v588
      %v595 = vmul.f32 %v585, %v588
      %602 = vrot.lane.b32.xlu0 %v590, 124
      %v603 = vpop.permute.xlu0 %602
      %604 = vrot.lane.b32.xlu0 %v591, 124
      %v605 = vpop.permute.xlu0 %604
      %606 = vrot.lane.b32.xlu0 %v592, 124
      %v607 = vpop.permute.xlu0 %606
      %608 = vrot.lane.b32.xlu0 %v593, 124
      %v609 = vpop.permute.xlu0 %608
      %610 = vrot.lane.b32.xlu0 %v594, 124
      %v611 = vpop.permute.xlu0 %610
      %612 = vrot.lane.b32.xlu0 %v595, 124
      %v613 = vpop.permute.xlu0 %612
      %620 = vst.msk [vmem:[#allocation6 + $0x90] sm:$0xff] %vm491, %v603
      %621 = vst.msk [vmem:[#allocation6 + $0x98] sm:$0xff] %vm491, %v605
      %622 = vst.msk [vmem:[#allocation6 + $0xa0] sm:$0xff] %vm491, %v607
      %623 = vst.msk [vmem:[#allocation6 + $0xa8] sm:$0xff] %vm491, %v609
      %624 = vst.msk [vmem:[#allocation6 + $0xb0] sm:$0xff] %vm491, %v611
      %625 = vst.msk [vmem:[#allocation6 + $0xb8] sm:$0xff] %vm491, %v613
      %v626 = vld [vmem:[#allocation4] sm:$0xff]
      %v627 = vld [vmem:[#allocation4 + $0x8] sm:$0xff]
      %v628 = vld [vmem:[#allocation4 + $0x10] sm:$0xff]
      %v629 = vld [vmem:[#allocation4 + $0x18] sm:$0xff]
      %v630 = vld [vmem:[#allocation4 + $0x20] sm:$0xff]
      %v631 = vld [vmem:[#allocation4 + $0x28] sm:$0xff]
      %638 = vrot.lane.b32.xlu0 %v626, 123
      %v639 = vpop.permute.xlu0 %638
      %640 = vrot.lane.b32.xlu0 %v627, 123
      %v641 = vpop.permute.xlu0 %640
      %642 = vrot.lane.b32.xlu0 %v628, 123
      %v643 = vpop.permute.xlu0 %642
      %644 = vrot.lane.b32.xlu0 %v629, 123
      %v645 = vpop.permute.xlu0 %644
      %646 = vrot.lane.b32.xlu0 %v630, 123
      %v647 = vpop.permute.xlu0 %646
      %648 = vrot.lane.b32.xlu0 %v631, 123
      %v649 = vpop.permute.xlu0 %648
      %656 = vst.msk [vmem:[#allocation6 + $0xc0] sm:$0xff] %vm491, %v639
      %657 = vst.msk [vmem:[#allocation6 + $0xc8] sm:$0xff] %vm491, %v641
      %658 = vst.msk [vmem:[#allocation6 + $0xd0] sm:$0xff] %vm491, %v643
      %659 = vst.msk [vmem:[#allocation6 + $0xd8] sm:$0xff] %vm491, %v645
      %660 = vst.msk [vmem:[#allocation6 + $0xe0] sm:$0xff] %vm491, %v647
      %661 = vst.msk [vmem:[#allocation6 + $0xe8] sm:$0xff] %vm491, %v649
      %v662 = vld [vmem:[#allocation4] sm:$0xff]
      %v663 = vld [vmem:[#allocation4 + $0x8] sm:$0xff]
      %v664 = vld [vmem:[#allocation4 + $0x10] sm:$0xff]
      %v665 = vld [vmem:[#allocation4 + $0x18] sm:$0xff]
      %v666 = vld [vmem:[#allocation4 + $0x20] sm:$0xff]
      %v667 = vld [vmem:[#allocation4 + $0x28] sm:$0xff]
      %668 = vrot.lane.b32.xlu0 %v415, 6
      %v669 = vpop.permute.xlu0 %668
      %v671 = vmul.f32 %v662, %v669
      %v672 = vmul.f32 %v663, %v669
      %v673 = vmul.f32 %v664, %v669
      %v674 = vmul.f32 %v665, %v669
      %v675 = vmul.f32 %v666, %v669
      %v676 = vmul.f32 %v667, %v669
      %683 = vrot.lane.b32.xlu0 %v671, 122
      %v684 = vpop.permute.xlu0 %683
      %685 = vrot.lane.b32.xlu0 %v672, 122
      %v686 = vpop.permute.xlu0 %685
      %687 = vrot.lane.b32.xlu0 %v673, 122
      %v688 = vpop.permute.xlu0 %687
      %689 = vrot.lane.b32.xlu0 %v674, 122
      %v690 = vpop.permute.xlu0 %689
      %691 = vrot.lane.b32.xlu0 %v675, 122
      %v692 = vpop.permute.xlu0 %691
      %693 = vrot.lane.b32.xlu0 %v676, 122
      %v694 = vpop.permute.xlu0 %693
      %701 = vst.msk [vmem:[#allocation6 + $0xf0] sm:$0xff] %vm491, %v684
      %702 = vst.msk [vmem:[#allocation6 + $0xf8] sm:$0xff] %vm491, %v686
      %703 = vst.msk [vmem:[#allocation6 + $0x100] sm:$0xff] %vm491, %v688
      %704 = vst.msk [vmem:[#allocation6 + $0x108] sm:$0xff] %vm491, %v690
      %705 = vst.msk [vmem:[#allocation6 + $0x110] sm:$0xff] %vm491, %v692
      %706 = vst.msk [vmem:[#allocation6 + $0x118] sm:$0xff] %vm491, %v694
      %v707 = vld [vmem:[#allocation4] sm:$0xff]
      %v708 = vld [vmem:[#allocation4 + $0x8] sm:$0xff]
      %v709 = vld [vmem:[#allocation4 + $0x10] sm:$0xff]
      %v710 = vld [vmem:[#allocation4 + $0x18] sm:$0xff]
      %v711 = vld [vmem:[#allocation4 + $0x20] sm:$0xff]
      %v712 = vld [vmem:[#allocation4 + $0x28] sm:$0xff]
      %713 = vrot.lane.b32.xlu0 %v412, 8
      %v714 = vpop.permute.xlu0 %713
      %v716 = vmul.f32 %v707, %v714
      %v717 = vmul.f32 %v708, %v714
      %v718 = vmul.f32 %v709, %v714
      %v719 = vmul.f32 %v710, %v714
      %v720 = vmul.f32 %v711, %v714
      %v721 = vmul.f32 %v712, %v714
      %728 = vrot.lane.b32.xlu0 %v716, 120
      %v729 = vpop.permute.xlu0 %728
      %730 = vrot.lane.b32.xlu0 %v717, 120
      %v731 = vpop.permute.xlu0 %730
      %732 = vrot.lane.b32.xlu0 %v718, 120
      %v733 = vpop.permute.xlu0 %732
      %734 = vrot.lane.b32.xlu0 %v719, 120
      %v735 = vpop.permute.xlu0 %734
      %736 = vrot.lane.b32.xlu0 %v720, 120
      %v737 = vpop.permute.xlu0 %736
      %738 = vrot.lane.b32.xlu0 %v721, 120
      %v739 = vpop.permute.xlu0 %738
      %746 = vst.msk [vmem:[#allocation6 + $0x120] sm:$0xff] %vm491, %v729
      %747 = vst.msk [vmem:[#allocation6 + $0x128] sm:$0xff] %vm491, %v731
      %748 = vst.msk [vmem:[#allocation6 + $0x130] sm:$0xff] %vm491, %v733
      %749 = vst.msk [vmem:[#allocation6 + $0x138] sm:$0xff] %vm491, %v735
      %750 = vst.msk [vmem:[#allocation6 + $0x140] sm:$0xff] %vm491, %v737
      %751 = vst.msk [vmem:[#allocation6 + $0x148] sm:$0xff] %vm491, %v739
      %v752 = vld [vmem:[#allocation4] sm:$0xff]
      %v753 = vld [vmem:[#allocation4 + $0x8] sm:$0xff]
      %v754 = vld [vmem:[#allocation4 + $0x10] sm:$0xff]
      %v755 = vld [vmem:[#allocation4 + $0x18] sm:$0xff]
      %v756 = vld [vmem:[#allocation4 + $0x20] sm:$0xff]
      %v757 = vld [vmem:[#allocation4 + $0x28] sm:$0xff]
      %764 = vrot.lane.b32.xlu0 %v752, 119
      %v765 = vpop.permute.xlu0 %764
      %766 = vrot.lane.b32.xlu0 %v753, 119
      %v767 = vpop.permute.xlu0 %766
      %768 = vrot.lane.b32.xlu0 %v754, 119
      %v769 = vpop.permute.xlu0 %768
      %770 = vrot.lane.b32.xlu0 %v755, 119
      %v771 = vpop.permute.xlu0 %770
      %772 = vrot.lane.b32.xlu0 %v756, 119
      %v773 = vpop.permute.xlu0 %772
      %774 = vrot.lane.b32.xlu0 %v757, 119
      %v775 = vpop.permute.xlu0 %774
      %782 = vst.msk [vmem:[#allocation6 + $0x150] sm:$0xff] %vm491, %v765
      %783 = vst.msk [vmem:[#allocation6 + $0x158] sm:$0xff] %vm491, %v767
      %784 = vst.msk [vmem:[#allocation6 + $0x160] sm:$0xff] %vm491, %v769
      %785 = vst.msk [vmem:[#allocation6 + $0x168] sm:$0xff] %vm491, %v771
      %786 = vst.msk [vmem:[#allocation6 + $0x170] sm:$0xff] %vm491, %v773
      %787 = vst.msk [vmem:[#allocation6 + $0x178] sm:$0xff] %vm491, %v775
      %v788 = vld [vmem:[#allocation4] sm:$0xff]
      %v789 = vld [vmem:[#allocation4 + $0x8] sm:$0xff]
      %v790 = vld [vmem:[#allocation4 + $0x10] sm:$0xff]
      %v791 = vld [vmem:[#allocation4 + $0x18] sm:$0xff]
      %v792 = vld [vmem:[#allocation4 + $0x20] sm:$0xff]
      %v793 = vld [vmem:[#allocation4 + $0x28] sm:$0xff]
      %794 = vrot.lane.b32.xlu0 %v415, 10
      %v795 = vpop.permute.xlu0 %794
      %v797 = vmul.f32 %v788, %v795
      %v798 = vmul.f32 %v789, %v795
      %v799 = vmul.f32 %v790, %v795
      %v800 = vmul.f32 %v791, %v795
      %v801 = vmul.f32 %v792, %v795
      %v802 = vmul.f32 %v793, %v795
      %809 = vrot.lane.b32.xlu0 %v797, 118
      %v810 = vpop.permute.xlu0 %809
      %811 = vrot.lane.b32.xlu0 %v798, 118
      %v812 = vpop.permute.xlu0 %811
      %813 = vrot.lane.b32.xlu0 %v799, 118
      %v814 = vpop.permute.xlu0 %813
      %815 = vrot.lane.b32.xlu0 %v800, 118
      %v816 = vpop.permute.xlu0 %815
      %817 = vrot.lane.b32.xlu0 %v801, 118
      %v818 = vpop.permute.xlu0 %817
      %819 = vrot.lane.b32.xlu0 %v802, 118
      %v820 = vpop.permute.xlu0 %819
      %827 = vst.msk [vmem:[#allocation6 + $0x180] sm:$0xff] %vm491, %v810
      %828 = vst.msk [vmem:[#allocation6 + $0x188] sm:$0xff] %vm491, %v812
      %829 = vst.msk [vmem:[#allocation6 + $0x190] sm:$0xff] %vm491, %v814
      %830 = vst.msk [vmem:[#allocation6 + $0x198] sm:$0xff] %vm491, %v816
      %831 = vst.msk [vmem:[#allocation6 + $0x1a0] sm:$0xff] %vm491, %v818
      %832 = vst.msk [vmem:[#allocation6 + $0x1a8] sm:$0xff] %vm491, %v820
      %v833 = vld [vmem:[%s372] sm:$0xff]
      %v834 = vld [vmem:[%s372 + $0x8] sm:$0xff]
      %v835 = vld [vmem:[%s372 + $0x10] sm:$0xff]
      %v836 = vld [vmem:[%s372 + $0x18] sm:$0xff]
      %v837 = vld [vmem:[#allocation6] sm:$0xff]
      %v838 = vld [vmem:[#allocation6 + $0x8] sm:$0xff]
      %v839 = vld [vmem:[#allocation6 + $0x10] sm:$0xff]
      %v840 = vld [vmem:[#allocation6 + $0x18] sm:$0xff]
      %v841 = vld [vmem:[#allocation6 + $0x20] sm:$0xff]
      %v842 = vld [vmem:[#allocation6 + $0x28] sm:$0xff]
      %v843 = vld [vmem:[#allocation6 + $0x30] sm:$0xff]
      %v844 = vld [vmem:[#allocation6 + $0x38] sm:$0xff]
      %v845 = vld [vmem:[#allocation6 + $0x40] sm:$0xff]
      %v846 = vld [vmem:[#allocation6 + $0x48] sm:$0xff]
      %v847 = vld [vmem:[#allocation6 + $0x50] sm:$0xff]
      %v848 = vld [vmem:[#allocation6 + $0x58] sm:$0xff]
      %v849 = vld [vmem:[#allocation6 + $0x60] sm:$0xff]
      %v850 = vld [vmem:[#allocation6 + $0x68] sm:$0xff]
      %v851 = vld [vmem:[#allocation6 + $0x70] sm:$0xff]
      %v852 = vld [vmem:[#allocation6 + $0x78] sm:$0xff]
      %v853 = vld [vmem:[#allocation6 + $0x80] sm:$0xff]
      %v854 = vld [vmem:[#allocation6 + $0x88] sm:$0xff]
      %v855 = vld [vmem:[#allocation6 + $0x90] sm:$0xff]
      %v856 = vld [vmem:[#allocation6 + $0x98] sm:$0xff]
      %v857 = vld [vmem:[#allocation6 + $0xa0] sm:$0xff]
      %v858 = vld [vmem:[#allocation6 + $0xa8] sm:$0xff]
      %v859 = vld [vmem:[#allocation6 + $0xb0] sm:$0xff]
      %v860 = vld [vmem:[#allocation6 + $0xb8] sm:$0xff]
      %v861 = vld [vmem:[#allocation6 + $0xc0] sm:$0xff]
      %v862 = vld [vmem:[#allocation6 + $0xc8] sm:$0xff]
      %v863 = vld [vmem:[#allocation6 + $0xd0] sm:$0xff]
      %v864 = vld [vmem:[#allocation6 + $0xd8] sm:$0xff]
      %v865 = vld [vmem:[#allocation6 + $0xe0] sm:$0xff]
      %v866 = vld [vmem:[#allocation6 + $0xe8] sm:$0xff]
      %v867 = vld [vmem:[#allocation6 + $0xf0] sm:$0xff]
      %v868 = vld [vmem:[#allocation6 + $0xf8] sm:$0xff]
      %v869 = vld [vmem:[#allocation6 + $0x100] sm:$0xff]
      %v870 = vld [vmem:[#allocation6 + $0x108] sm:$0xff]
      %v871 = vld [vmem:[#allocation6 + $0x110] sm:$0xff]
      %v872 = vld [vmem:[#allocation6 + $0x118] sm:$0xff]
      %v873 = vld [vmem:[#allocation6 + $0x120] sm:$0xff]
      %v874 = vld [vmem:[#allocation6 + $0x128] sm:$0xff]
      %v875 = vld [vmem:[#allocation6 + $0x130] sm:$0xff]
      %v876 = vld [vmem:[#allocation6 + $0x138] sm:$0xff]
      %v877 = vld [vmem:[#allocation6 + $0x140] sm:$0xff]
      %v878 = vld [vmem:[#allocation6 + $0x148] sm:$0xff]
      %v879 = vld [vmem:[#allocation6 + $0x150] sm:$0xff]
      %v880 = vld [vmem:[#allocation6 + $0x158] sm:$0xff]
      %v881 = vld [vmem:[#allocation6 + $0x160] sm:$0xff]
      %v882 = vld [vmem:[#allocation6 + $0x168] sm:$0xff]
      %v883 = vld [vmem:[#allocation6 + $0x170] sm:$0xff]
      %v884 = vld [vmem:[#allocation6 + $0x178] sm:$0xff]
      %v885 = vld [vmem:[#allocation6 + $0x180] sm:$0xff]
      %v886 = vld [vmem:[#allocation6 + $0x188] sm:$0xff]
      %v887 = vld [vmem:[#allocation6 + $0x190] sm:$0xff]
      %v888 = vld [vmem:[#allocation6 + $0x198] sm:$0xff]
      %v889 = vld [vmem:[#allocation6 + $0x1a0] sm:$0xff]
      %v890 = vld [vmem:[#allocation6 + $0x1a8] sm:$0xff]
      %v891 = vld [vmem:[%s376] sm:$0xff]
      %893 = vset.pattern.permute.xlu0 0
      %894 = vperm.xlu0 %893, %v891
      %v895 = vpop.permute.xlu0 %894
      %vm897 = vcmask 392192
      %v899 = vsel %vm897, %v836, 0
      %901 = vmatprep.subr.mxu0 0.0
      %902 = vmatpush1.msra.mxu0 %v837
      %903 = vmatprep.subr.mxu0 0.0
      %904 = vmatpush1.msra.mxu0 %v838
      %905 = vmatprep.subr.mxu0 0.0
      %906 = vmatpush1.msra.mxu0 %v839
      %907 = vmatprep.subr.mxu0 0.0
      %908 = vmatpush1.msra.mxu0 %v840
      %909 = vmatprep.subr.mxu0 0.0
      %910 = vmatpush1.msra.mxu0 %v841
      %911 = vmatprep.subr.mxu0 0.0
      %912 = vmatpush1.msra.mxu0 %v842
      %913 = vmatprep.subr.mxu0 0.0
      %914 = vmatpush1.msra.mxu0 %v843
      %915 = vmatprep.subr.mxu0 0.0
      %916 = vmatpush1.msra.mxu0 %v844
      %917 = vmatprep.subr.mxu0 0.0
      %918 = vmatpush1.msra.mxu0 %v845
      %919 = vmatprep.subr.mxu0 0.0
      %920 = vmatpush1.msra.mxu0 %v846
      %921 = vmatprep.subr.mxu0 0.0
      %922 = vmatpush1.msra.mxu0 %v847
      %923 = vmatprep.subr.mxu0 0.0
      %924 = vmatpush1.msra.mxu0 %v848
      %925 = vmatprep.subr.mxu0 0.0
      %926 = vmatpush1.msra.mxu0 %v849
      %927 = vmatprep.subr.mxu0 0.0
      %928 = vmatpush1.msra.mxu0 %v850
      %929 = vmatprep.subr.mxu0 0.0
      %930 = vmatpush1.msra.mxu0 %v851
      %931 = vmatprep.subr.mxu0 0.0
      %932 = vmatpush1.msra.mxu0 %v852
      %933 = vmatprep.subr.mxu0 0.0
      %934 = vmatpush1.msra.mxu0 %v853
      %935 = vmatprep.subr.mxu0 0.0
      %936 = vmatpush1.msra.mxu0 %v854
      %937 = vmatprep.subr.mxu0 0.0
      %938 = vmatpush1.msra.mxu0 %v855
      %939 = vmatprep.subr.mxu0 0.0
      %940 = vmatpush1.msra.mxu0 %v856
      %941 = vmatprep.subr.mxu0 0.0
      %942 = vmatpush1.msra.mxu0 %v857
      %943 = vmatprep.subr.mxu0 0.0
      %944 = vmatpush1.msra.mxu0 %v858
      %945 = vmatprep.subr.mxu0 0.0
      %946 = vmatpush1.msra.mxu0 %v859
      %947 = vmatprep.subr.mxu0 0.0
      %948 = vmatpush1.msra.mxu0 %v860
      %949 = vmatprep.subr.mxu0 0.0
      %950 = vmatpush1.msra.mxu0 %v861
      %951 = vmatprep.subr.mxu0 0.0
      %952 = vmatpush1.msra.mxu0 %v862
      %953 = vmatprep.subr.mxu0 0.0
      %954 = vmatpush1.msra.mxu0 %v863
      %955 = vmatprep.subr.mxu0 0.0
      %956 = vmatpush1.msra.mxu0 %v864
      %957 = vmatprep.subr.mxu0 0.0
      %958 = vmatpush1.msra.mxu0 %v865
      %959 = vmatprep.subr.mxu0 0.0
      %960 = vmatpush1.msra.mxu0 %v866
      %961 = vmatprep.subr.mxu0 0.0
      %962 = vmatpush1.msra.mxu0 %v867
      %963 = vmatprep.subr.mxu0 0.0
      %964 = vmatpush1.msra.mxu0 %v868
      %965 = vmatprep.mubr.f32.mxu0 %v834
      %966 = vmatmul.mubr.f32.gmra.mrb[0].mxu0 %v833
      %v967 = vpop.f32.mrb[0].mxu0
      %v968 = vadd.f32 %v895, %v967
      %v969 = vpop.f32.mrb[0].mxu0
      %970 = vdwg.mxu0
      %971 = vmatprep.subr.mxu0 0.0
      %972 = vmatpush1.msra.mxu0 %v869
      %973 = vmatprep.subr.mxu0 0.0
      %974 = vmatpush1.msra.mxu0 %v870
      %975 = vmatprep.subr.mxu0 0.0
      %976 = vmatpush1.msra.mxu0 %v871
      %977 = vmatprep.subr.mxu0 0.0
      %978 = vmatpush1.msra.mxu0 %v872
      %979 = vmatprep.subr.mxu0 0.0
      %980 = vmatpush1.msra.mxu0 %v873
      %981 = vmatprep.subr.mxu0 0.0
      %982 = vmatpush1.msra.mxu0 %v874
      %983 = vmatprep.subr.mxu0 0.0
      %984 = vmatpush1.msra.mxu0 %v875
      %985 = vmatprep.subr.mxu0 0.0
      %986 = vmatpush1.msra.mxu0 %v876
      %987 = vmatprep.subr.mxu0 0.0
      %988 = vmatpush1.msra.mxu0 %v877
      %989 = vmatprep.subr.mxu0 0.0
      %990 = vmatpush1.msra.mxu0 %v878
      %991 = vmatprep.subr.mxu0 0.0
      %992 = vmatpush1.msra.mxu0 %v879
      %993 = vmatprep.subr.mxu0 0.0
      %994 = vmatpush1.msra.mxu0 %v880
      %995 = vmatprep.subr.mxu0 0.0
      %996 = vmatpush1.msra.mxu0 %v881
      %997 = vmatprep.subr.mxu0 0.0
      %998 = vmatpush1.msra.mxu0 %v882
      %999 = vmatprep.subr.mxu0 0.0
      %1000 = vmatpush1.msra.mxu0 %v883
      %1001 = vmatprep.subr.mxu0 0.0
      %1002 = vmatpush1.msra.mxu0 %v884
      %1003 = vmatprep.subr.mxu0 0.0
      %1004 = vmatpush1.msra.mxu0 %v885
      %1005 = vmatprep.subr.mxu0 0.0
      %1006 = vmatpush1.msra.mxu0 %v886
      %1007 = vmatprep.subr.mxu0 0.0
      %1008 = vmatpush1.msra.mxu0 %v887
      %1009 = vmatprep.subr.mxu0 0.0
      %1010 = vmatpush1.msra.mxu0 %v888
      %1011 = vmatprep.subr.mxu0 0.0
      %1012 = vmatpush1.msra.mxu0 %v889
      %1013 = vmatprep.subr.mxu0 0.0
      %1014 = vmatpush1.msra.mxu0 %v890
      %1015 = vmatprep.subr.mxu0 0.0
      %1016 = vmatpush1.msra.mxu0 0.0
      %1017 = vmatprep.subr.mxu0 0.0
      %1018 = vmatpush1.msra.mxu0 0.0
      %1019 = vmatprep.subr.mxu0 0.0
      %1020 = vmatpush1.msra.mxu0 0.0
      %1021 = vmatprep.subr.mxu0 0.0
      %1022 = vmatpush1.msra.mxu0 0.0
      %1023 = vmatprep.subr.mxu0 0.0
      %1024 = vmatpush1.msra.mxu0 0.0
      %1025 = vmatprep.subr.mxu0 0.0
      %1026 = vmatpush1.msra.mxu0 0.0
      %1027 = vmatprep.subr.mxu0 0.0
      %1028 = vmatpush1.msra.mxu0 0.0
      %1029 = vmatprep.subr.mxu0 0.0
      %1030 = vmatpush1.msra.mxu0 0.0
      %1031 = vmatprep.subr.mxu0 0.0
      %1032 = vmatpush1.msra.mxu0 0.0
      %1033 = vmatprep.subr.mxu0 0.0
      %1034 = vmatpush1.msra.mxu0 0.0
      %1035 = vmatprep.mubr.f32.mxu0 %v899
      %1036 = vmatmul.mubr.f32.gmra.mrb[0].mxu0 %v835
      %v1037 = vpop.f32.mrb[0].mxu0
      %v1038 = vadd.f32 %v968, %v1037
      %v1039 = vpop.f32.mrb[0].mxu0
      %1040 = vdwg.mxu0
      %v1041 = vld [vmem:[#allocation2] sm:$0xff]
      %v1042 = vadd.f32 %v1041, %v1038
      %1043 = vst.msk [vmem:[#allocation5] sm:$0xff] %vm441, 0.0
      %1045 = vrot.lane.b32.xlu0 %v1042, 5
      %v1046 = vpop.permute.xlu0 %1045
      %1048 = vst.msk [vmem:[#allocation5] sm:$0xff] %vm472, %v1046
      %v1049 = vld [vmem:[#allocation5] sm:$0xff]
      %v1050 = vmul.f32 %v1049, %v412
      %1051 = vst.msk [vmem:[#allocation7] sm:$0xff] %vm491, %v1050
      %v1052 = vld [vmem:[#allocation5] sm:$0xff]
      %1054 = vrot.lane.b32.xlu0 %v1052, 127
      %v1055 = vpop.permute.xlu0 %1054
      %1057 = vst.msk [vmem:[#allocation7 + $0x8] sm:$0xff] %vm491, %v1055
      %v1058 = vld [vmem:[#allocation5] sm:$0xff]
      %v1059 = vmul.f32 %v1058, %v542
      %1061 = vrot.lane.b32.xlu0 %v1059, 126
      %v1062 = vpop.permute.xlu0 %1061
      %1064 = vst.msk [vmem:[#allocation7 + $0x10] sm:$0xff] %vm491, %v1062
      %v1065 = vld [vmem:[#allocation5] sm:$0xff]
      %v1066 = vmul.f32 %v1065, %v588
      %1068 = vrot.lane.b32.xlu0 %v1066, 124
      %v1069 = vpop.permute.xlu0 %1068
      %1071 = vst.msk [vmem:[#allocation7 + $0x18] sm:$0xff] %vm491, %v1069
      %v1072 = vld [vmem:[#allocation5] sm:$0xff]
      %1074 = vrot.lane.b32.xlu0 %v1072, 123
      %v1075 = vpop.permute.xlu0 %1074
      %1077 = vst.msk [vmem:[#allocation7 + $0x20] sm:$0xff] %vm491, %v1075
      %v1078 = vld [vmem:[#allocation5] sm:$0xff]
      %v1079 = vmul.f32 %v1078, %v669
      %1081 = vrot.lane.b32.xlu0 %v1079, 122
      %v1082 = vpop.permute.xlu0 %1081
      %1084 = vst.msk [vmem:[#allocation7 + $0x28] sm:$0xff] %vm491, %v1082
      %v1085 = vld [vmem:[#allocation5] sm:$0xff]
      %v1086 = vmul.f32 %v1085, %v714
      %1088 = vrot.lane.b32.xlu0 %v1086, 120
      %v1089 = vpop.permute.xlu0 %1088
      %1091 = vst.msk [vmem:[#allocation7 + $0x30] sm:$0xff] %vm491, %v1089
      %v1092 = vld [vmem:[#allocation5] sm:$0xff]
      %1094 = vrot.lane.b32.xlu0 %v1092, 119
      %v1095 = vpop.permute.xlu0 %1094
      %1097 = vst.msk [vmem:[#allocation7 + $0x38] sm:$0xff] %vm491, %v1095
      %v1098 = vld [vmem:[#allocation5] sm:$0xff]
      %v1099 = vmul.f32 %v1098, %v795
      %1101 = vrot.lane.b32.xlu0 %v1099, 118
      %v1102 = vpop.permute.xlu0 %1101
      %1104 = vst.msk [vmem:[#allocation7 + $0x40] sm:$0xff] %vm491, %v1102
      %v1105 = vld [vmem:[%s381] sm:$0xff]
      %v1106 = vld [vmem:[%s381 + $0x8] sm:$0xff]
      %v1107 = vld [vmem:[%s381 + $0x10] sm:$0xff]
      %v1108 = vld [vmem:[%s381 + $0x18] sm:$0xff]
      %v1109 = vld [vmem:[%s381 + $0x20] sm:$0xff]
      %v1110 = vld [vmem:[%s381 + $0x28] sm:$0xff]
      %v1111 = vld [vmem:[%s381 + $0x30] sm:$0xff]
      %v1112 = vld [vmem:[%s381 + $0x38] sm:$0xff]
      %v1113 = vld [vmem:[%s381 + $0x40] sm:$0xff]
      %v1114 = vld [vmem:[%s381 + $0x48] sm:$0xff]
      %v1115 = vld [vmem:[%s381 + $0x50] sm:$0xff]
      %v1116 = vld [vmem:[%s381 + $0x58] sm:$0xff]
      %v1117 = vld [vmem:[#allocation7] sm:$0xff]
      %v1118 = vld [vmem:[#allocation7 + $0x8] sm:$0xff]
      %v1119 = vld [vmem:[#allocation7 + $0x10] sm:$0xff]
      %v1120 = vld [vmem:[#allocation7 + $0x18] sm:$0xff]
      %v1121 = vld [vmem:[#allocation7 + $0x20] sm:$0xff]
      %v1122 = vld [vmem:[#allocation7 + $0x28] sm:$0xff]
      %v1123 = vld [vmem:[#allocation7 + $0x30] sm:$0xff]
      %v1124 = vld [vmem:[#allocation7 + $0x38] sm:$0xff]
      %v1125 = vld [vmem:[#allocation7 + $0x40] sm:$0xff]
      %v1126 = vld [vmem:[%s386] sm:$0xff]
      %v1127 = vld [vmem:[%s386 + $0x8] sm:$0xff]
      %v1128 = vld [vmem:[%s386 + $0x10] sm:$0xff]
      %v1129 = vld [vmem:[%s386 + $0x18] sm:$0xff]
      %v1130 = vld [vmem:[%s386 + $0x20] sm:$0xff]
      %v1131 = vld [vmem:[%s386 + $0x28] sm:$0xff]
      %v1132 = vld [vmem:[%s386 + $0x30] sm:$0xff]
      %v1133 = vld [vmem:[%s386 + $0x38] sm:$0xff]
      %v1134 = vld [vmem:[%s386 + $0x40] sm:$0xff]
      %v1135 = vld [vmem:[%s386 + $0x48] sm:$0xff]
      %v1136 = vld [vmem:[%s386 + $0x50] sm:$0xff]
      %v1137 = vld [vmem:[%s386 + $0x58] sm:$0xff]
      %1139 = vset.pattern.permute.xlu0 0
      %1140 = vperm.xlu0 %1139, %v1126
      %v1141 = vpop.permute.xlu0 %1140
      %1144 = vset.pattern.permute.xlu0 0
      %1145 = vperm.xlu0 %1144, %v1127
      %v1146 = vpop.permute.xlu0 %1145
      %1149 = vset.pattern.permute.xlu0 0
      %1150 = vperm.xlu0 %1149, %v1128
      %v1151 = vpop.permute.xlu0 %1150
      %1154 = vset.pattern.permute.xlu0 0
      %1155 = vperm.xlu0 %1154, %v1129
      %v1156 = vpop.permute.xlu0 %1155
      %1159 = vset.pattern.permute.xlu0 0
      %1160 = vperm.xlu0 %1159, %v1130
      %v1161 = vpop.permute.xlu0 %1160
      %1164 = vset.pattern.permute.xlu0 0
      %1165 = vperm.xlu0 %1164, %v1131
      %v1166 = vpop.permute.xlu0 %1165
      %1169 = vset.pattern.permute.xlu0 0
      %1170 = vperm.xlu0 %1169, %v1132
      %v1171 = vpop.permute.xlu0 %1170
      %1174 = vset.pattern.permute.xlu0 0
      %1175 = vperm.xlu0 %1174, %v1133
      %v1176 = vpop.permute.xlu0 %1175
      %1179 = vset.pattern.permute.xlu0 0
      %1180 = vperm.xlu0 %1179, %v1134
      %v1181 = vpop.permute.xlu0 %1180
      %1184 = vset.pattern.permute.xlu0 0
      %1185 = vperm.xlu0 %1184, %v1135
      %v1186 = vpop.permute.xlu0 %1185
      %1189 = vset.pattern.permute.xlu0 0
      %1190 = vperm.xlu0 %1189, %v1136
      %v1191 = vpop.permute.xlu0 %1190
      %1194 = vset.pattern.permute.xlu0 0
      %1195 = vperm.xlu0 %1194, %v1137
      %v1196 = vpop.permute.xlu0 %1195
      %vm1198 = vcmask 588800
      %v1200 = vsel %vm1198, %v1105, 0
      %v1203 = vsel %vm1198, %v1106, 0
      %v1206 = vsel %vm1198, %v1107, 0
      %v1209 = vsel %vm1198, %v1108, 0
      %v1212 = vsel %vm1198, %v1109, 0
      %v1215 = vsel %vm1198, %v1110, 0
      %v1218 = vsel %vm1198, %v1111, 0
      %v1221 = vsel %vm1198, %v1112, 0
      %v1224 = vsel %vm1198, %v1113, 0
      %v1227 = vsel %vm1198, %v1114, 0
      %v1230 = vsel %vm1198, %v1115, 0
      %v1233 = vsel %vm1198, %v1116, 0
      %1235 = vmatprep.subr.mxu0 0.0
      %1236 = vmatpush1.msra.mxu0 %v1117
      %1237 = vmatprep.subr.mxu0 0.0
      %1238 = vmatpush1.msra.mxu0 %v1118
      %1239 = vmatprep.subr.mxu0 0.0
      %1240 = vmatpush1.msra.mxu0 %v1119
      %1241 = vmatprep.subr.mxu0 0.0
      %1242 = vmatpush1.msra.mxu0 %v1120
      %1243 = vmatprep.subr.mxu0 0.0
      %1244 = vmatpush1.msra.mxu0 %v1121
      %1245 = vmatprep.subr.mxu0 0.0
      %1246 = vmatpush1.msra.mxu0 %v1122
      %1247 = vmatprep.subr.mxu0 0.0
      %1248 = vmatpush1.msra.mxu0 %v1123
      %1249 = vmatprep.subr.mxu0 0.0
      %1250 = vmatpush1.msra.mxu0 %v1124
      %1251 = vmatprep.subr.mxu0 0.0
      %1252 = vmatpush1.msra.mxu0 %v1125
      %1253 = vmatprep.subr.mxu0 0.0
      %1254 = vmatpush1.msra.mxu0 0.0
      %1255 = vmatprep.subr.mxu0 0.0
      %1256 = vmatpush1.msra.mxu0 0.0
      %1257 = vmatprep.subr.mxu0 0.0
      %1258 = vmatpush1.msra.mxu0 0.0
      %1259 = vmatprep.subr.mxu0 0.0
      %1260 = vmatpush1.msra.mxu0 0.0
      %1261 = vmatprep.subr.mxu0 0.0
      %1262 = vmatpush1.msra.mxu0 0.0
      %1263 = vmatprep.subr.mxu0 0.0
      %1264 = vmatpush1.msra.mxu0 0.0
      %1265 = vmatprep.subr.mxu0 0.0
      %1266 = vmatpush1.msra.mxu0 0.0
      %1267 = vmatprep.subr.mxu0 0.0
      %1268 = vmatpush1.msra.mxu0 0.0
      %1269 = vmatprep.subr.mxu0 0.0
      %1270 = vmatpush1.msra.mxu0 0.0
      %1271 = vmatprep.subr.mxu0 0.0
      %1272 = vmatpush1.msra.mxu0 0.0
      %1273 = vmatprep.subr.mxu0 0.0
      %1274 = vmatpush1.msra.mxu0 0.0
      %1275 = vmatprep.subr.mxu0 0.0
      %1276 = vmatpush1.msra.mxu0 0.0
      %1277 = vmatprep.subr.mxu0 0.0
      %1278 = vmatpush1.msra.mxu0 0.0
      %1279 = vmatprep.subr.mxu0 0.0
      %1280 = vmatpush1.msra.mxu0 0.0
      %1281 = vmatprep.subr.mxu0 0.0
      %1282 = vmatpush1.msra.mxu0 0.0
      %1283 = vmatprep.subr.mxu0 0.0
      %1284 = vmatpush1.msra.mxu0 0.0
      %1285 = vmatprep.subr.mxu0 0.0
      %1286 = vmatpush1.msra.mxu0 0.0
      %1287 = vmatprep.subr.mxu0 0.0
      %1288 = vmatpush1.msra.mxu0 0.0
      %1289 = vmatprep.subr.mxu0 0.0
      %1290 = vmatpush1.msra.mxu0 0.0
      %1291 = vmatprep.subr.mxu0 0.0
      %1292 = vmatpush1.msra.mxu0 0.0
      %1293 = vmatprep.subr.mxu0 0.0
      %1294 = vmatpush1.msra.mxu0 0.0
      %1295 = vmatprep.subr.mxu0 0.0
      %1296 = vmatpush1.msra.mxu0 0.0
      %1297 = vmatprep.subr.mxu0 0.0
      %1298 = vmatpush1.msra.mxu0 0.0
      %1299 = vmatprep.mubr.f32.mxu0 0.0
      %1300 = vmatmul.mubr.f32.gmra.mrb[0].mxu0 %v1200
      %v1301 = vpop.f32.mrb[0].mxu0
      %v1302 = vadd.f32 %v1141, %v1301
      %v1303 = vpop.f32.mrb[0].mxu0
      %1304 = vmatprep.mubr.f32.mxu0 0.0
      %1305 = vmatmul.mubr.f32.gmra.mrb[0].mxu0 %v1203
      %v1306 = vpop.f32.mrb[0].mxu0
      %v1307 = vadd.f32 %v1146, %v1306
      %v1308 = vpop.f32.mrb[0].mxu0
      %1309 = vmatprep.mubr.f32.mxu0 0.0
      %1310 = vmatmul.mubr.f32.gmra.mrb[0].mxu0 %v1206
      %v1311 = vpop.f32.mrb[0].mxu0
      %v1312 = vadd.f32 %v1151, %v1311
      %v1313 = vpop.f32.mrb[0].mxu0
      %1314 = vmatprep.mubr.f32.mxu0 0.0
      %1315 = vmatmul.mubr.f32.gmra.mrb[0].mxu0 %v1209
      %v1316 = vpop.f32.mrb[0].mxu0
      %v1317 = vadd.f32 %v1156, %v1316
      %v1318 = vpop.f32.mrb[0].mxu0
      %1319 = vmatprep.mubr.f32.mxu0 0.0
      %1320 = vmatmul.mubr.f32.gmra.mrb[0].mxu0 %v1212
      %v1321 = vpop.f32.mrb[0].mxu0
      %v1322 = vadd.f32 %v1161, %v1321
      %v1323 = vpop.f32.mrb[0].mxu0
      %1324 = vmatprep.mubr.f32.mxu0 0.0
      %1325 = vmatmul.mubr.f32.gmra.mrb[0].mxu0 %v1215
      %v1326 = vpop.f32.mrb[0].mxu0
      %v1327 = vadd.f32 %v1166, %v1326
      %v1328 = vpop.f32.mrb[0].mxu0
      %1329 = vmatprep.mubr.f32.mxu0 0.0
      %1330 = vmatmul.mubr.f32.gmra.mrb[0].mxu0 %v1218
      %v1331 = vpop.f32.mrb[0].mxu0
      %v1332 = vadd.f32 %v1171, %v1331
      %v1333 = vpop.f32.mrb[0].mxu0
      %1334 = vmatprep.mubr.f32.mxu0 0.0
      %1335 = vmatmul.mubr.f32.gmra.mrb[0].mxu0 %v1221
      %v1336 = vpop.f32.mrb[0].mxu0
      %v1337 = vadd.f32 %v1176, %v1336
      %v1338 = vpop.f32.mrb[0].mxu0
      %1339 = vmatprep.mubr.f32.mxu0 0.0
      %1340 = vmatmul.mubr.f32.gmra.mrb[0].mxu0 %v1224
      %v1341 = vpop.f32.mrb[0].mxu0
      %v1342 = vadd.f32 %v1181, %v1341
      %v1343 = vpop.f32.mrb[0].mxu0
      %1344 = vmatprep.mubr.f32.mxu0 0.0
      %1345 = vmatmul.mubr.f32.gmra.mrb[0].mxu0 %v1227
      %v1346 = vpop.f32.mrb[0].mxu0
      %v1347 = vadd.f32 %v1186, %v1346
      %v1348 = vpop.f32.mrb[0].mxu0
      %1349 = vmatprep.mubr.f32.mxu0 0.0
      %1350 = vmatmul.mubr.f32.gmra.mrb[0].mxu0 %v1230
      %v1351 = vpop.f32.mrb[0].mxu0
      %v1352 = vadd.f32 %v1191, %v1351
      %v1353 = vpop.f32.mrb[0].mxu0
      %1354 = vmatprep.mubr.f32.mxu0 0.0
      %1355 = vmatmul.mubr.f32.gmra.mrb[0].mxu0 %v1233
      %v1356 = vpop.f32.mrb[0].mxu0
      %v1357 = vadd.f32 %v1196, %v1356
      %v1358 = vpop.f32.mrb[0].mxu0
      %1359 = vdwg.mxu0
      %v1360 = vxor.u32 %v1302, 2147483648
      %v1361 = vxor.u32 %v1307, 2147483648
      %v1362 = vxor.u32 %v1312, 2147483648
      %v1363 = vxor.u32 %v1317, 2147483648
      %v1364 = vxor.u32 %v1322, 2147483648
      %v1365 = vxor.u32 %v1327, 2147483648
      %v1366 = vmul.f32 %v1360, 1.442695
      %v1367 = vpow.pop %v1366
      %v1368 = vmul.f32 %v1361, 1.442695
      %v1369 = vpow.pop %v1368
      %v1370 = vmul.f32 %v1362, 1.442695
      %v1371 = vpow.pop %v1370
      %v1372 = vmul.f32 %v1363, 1.442695
      %v1373 = vpow.pop %v1372
      %v1374 = vmul.f32 %v1364, 1.442695
      %v1375 = vpow.pop %v1374
      %v1376 = vmul.f32 %v1365, 1.442695
      %v1377 = vpow.pop %v1376
      %v1378 = vadd.f32 %v1367, 1.0
      %v1379 = vadd.f32 %v1369, 1.0
      %v1380 = vadd.f32 %v1371, 1.0
      %v1381 = vadd.f32 %v1373, 1.0
      %v1382 = vadd.f32 %v1375, 1.0
      %v1383 = vadd.f32 %v1377, 1.0
      %v1384 = vrcp.pop %v1378
      %v1385 = vmul.f32 1.0, %v1384
      %v1386 = vrcp.pop %v1379
      %v1387 = vmul.f32 1.0, %v1386
      %v1388 = vrcp.pop %v1380
      %v1389 = vmul.f32 1.0, %v1388
      %v1390 = vrcp.pop %v1381
      %v1391 = vmul.f32 1.0, %v1390
      %v1392 = vrcp.pop %v1382
      %v1393 = vmul.f32 1.0, %v1392
      %v1394 = vrcp.pop %v1383
      %v1395 = vmul.f32 1.0, %v1394
      %v1396 = vmul.f32 %v1385, 2.0
      %v1397 = vmul.f32 %v1387, 2.0
      %v1398 = vmul.f32 %v1389, 2.0
      %v1399 = vmul.f32 %v1391, 2.0
      %v1400 = vmul.f32 %v1393, 2.0
      %v1401 = vmul.f32 %v1395, 2.0
      %v1402 = vsub.f32 %v1396, 1.0
      %v1403 = vsub.f32 %v1397, 1.0
      %v1404 = vsub.f32 %v1398, 1.0
      %v1405 = vsub.f32 %v1399, 1.0
      %v1406 = vsub.f32 %v1400, 1.0
      %v1407 = vsub.f32 %v1401, 1.0
      %v1408 = vmul.f32 %v1402, 1.442695
      %v1409 = vpow.pop %v1408
      %v1410 = vmul.f32 %v1403, 1.442695
      %v1411 = vpow.pop %v1410
      %v1412 = vmul.f32 %v1404, 1.442695
      %v1413 = vpow.pop %v1412
      %v1414 = vmul.f32 %v1405, 1.442695
      %v1415 = vpow.pop %v1414
      %v1416 = vmul.f32 %v1406, 1.442695
      %v1417 = vpow.pop %v1416
      %v1418 = vmul.f32 %v1407, 1.442695
      %v1419 = vpow.pop %v1418
      %v1420 = vmul.f32 %v435, %v1409
      %v1421 = vmul.f32 %v436, %v1411
      %v1422 = vmul.f32 %v437, %v1413
      %v1423 = vmul.f32 %v438, %v1415
      %v1424 = vmul.f32 %v439, %v1417
      %v1425 = vmul.f32 %v440, %v1419
      %v1426 = vadd.f32 %v1420, %v1332
      %v1427 = vadd.f32 %v1421, %v1337
      %v1428 = vadd.f32 %v1422, %v1342
      %v1429 = vadd.f32 %v1423, %v1347
      %v1430 = vadd.f32 %v1424, %v1352
      %v1431 = vadd.f32 %v1425, %v1357
      %1432 = vst.msk [vmem:[#allocation2] sm:$0xff] %vm491, %v1042
      %1433 = vst.msk [vmem:[#allocation3] sm:$0xff] %vm491, %v1426
      %1434 = vst.msk [vmem:[#allocation3 + $0x8] sm:$0xff] %vm491, %v1427
      %1435 = vst.msk [vmem:[#allocation3 + $0x10] sm:$0xff] %vm491, %v1428
      %1436 = vst.msk [vmem:[#allocation3 + $0x18] sm:$0xff] %vm491, %v1429
      %1437 = vst.msk [vmem:[#allocation3 + $0x20] sm:$0xff] %vm491, %v1430
      %1438 = vst.msk [vmem:[#allocation3 + $0x28] sm:$0xff] %vm491, %v1431
      %1439 = vst.msk [vmem:[%s390] sm:$0xff] %vm491, %v1042
      %1440 = vst.msk [vmem:[%s395] sm:$0xff] %vm491, %v1426
      %1441 = vst.msk [vmem:[%s395 + $0x8] sm:$0xff] %vm491, %v1427
      %1442 = vst.msk [vmem:[%s395 + $0x10] sm:$0xff] %vm491, %v1428
      %1443 = vst.msk [vmem:[%s395 + $0x18] sm:$0xff] %vm491, %v1429
      %1444 = vst.msk [vmem:[%s395 + $0x20] sm:$0xff] %vm491, %v1430
      %1445 = vst.msk [vmem:[%s395 + $0x28] sm:$0xff] %vm491, %v1431
      %p1446 = scmp.lt.s32.totalorder %s23, 1
      %s1447 = scalar_select %p1446, %s23, 1
      %s1448 = smul.addr %s1447, 8
      %s1449 = scalar_lea.vmem %s6, %s1448
      %p1450 = scmp.lt.s32.totalorder %s23, 1
      %s1451 = scalar_select %p1450, %s23, 1
      %s1452 = smul.addr %s1451, 6
      %s1453 = smul.addr %s1452, 8
      %s1454 = scalar_lea.vmem %s7, %s1453
      // Predicated region
      $region49: #{selfc_invnet_forward.3} parent=43 // pred_check
        %p1455 = pneg %p205
      $region50: #{selfc_invnet_forward.3} parent=43 // pred_check_branch
        %1457 = sbr.rel (%p1455) target = $region52
      $region51: #{selfc_invnet_forward.3} parent=43 // pred_region
        _
      $region52: #{selfc_invnet_forward.3} parent=43 // pred_fallthru
        _
      // Predicated region
      $region53: #{selfc_invnet_forward.3} parent=43 // pred_check
        %p1458 = pneg %p231
      $region54: #{selfc_invnet_forward.3} parent=43 // pred_check_branch
        %1460 = sbr.rel (%p1458) target = $region56
      $region55: #{selfc_invnet_forward.3} parent=43 // pred_region
        _
      $region56: #{selfc_invnet_forward.3} parent=43 // pred_fallthru
        _
    $region44: #{selfc_invnet_forward.3} parent=5 // pred_fallthru
      _
    %p1461 = scmp.le.s32.totalorder 2, %s14
    // Predicated region
    $region57: #{selfc_invnet_forward.3} parent=5 // pred_check
      %p1462 = pneg %p1461
    $region58: #{selfc_invnet_forward.3} parent=5 // pred_check_branch
      %1464 = sbr.rel (%p1462) target = $region60
    $region59: #{selfc_invnet_forward.3} parent=5 // pred_region
      %s1465 = ssub.s32 %s14, 2
      // Predicated region
      $region61: #{selfc_invnet_forward.3} parent=59 // pred_check
        %p1466 = pneg %p211
      $region62: #{selfc_invnet_forward.3} parent=59 // pred_check_branch
        %1468 = sbr.rel (%p1466) target = $region64
      $region63: #{selfc_invnet_forward.3} parent=59 // pred_region
        %p1469 = scmp.lt.s32.totalorder %s25, 1
        %s1470 = scalar_select %p1469, %s25, 1
        %s1471 = smul.addr %s1470, 8
        %s1472 = scalar_lea.vmem %s6, %s1471
      $region64: #{selfc_invnet_forward.3} parent=59 // pred_fallthru
        _
      // Predicated region
      $region65: #{selfc_invnet_forward.3} parent=59 // pred_check
        %p1473 = pneg %p237
      $region66: #{selfc_invnet_forward.3} parent=59 // pred_check_branch
        %1475 = sbr.rel (%p1473) target = $region68
      $region67: #{selfc_invnet_forward.3} parent=59 // pred_region
        %p1476 = scmp.lt.s32.totalorder %s25, 1
        %s1477 = scalar_select %p1476, %s25, 1
        %s1478 = smul.addr %s1477, 6
        %s1479 = smul.addr %s1478, 8
        %s1480 = scalar_lea.vmem %s7, %s1479
      $region68: #{selfc_invnet_forward.3} parent=59 // pred_fallthru
        _
    $region60: #{selfc_invnet_forward.3} parent=5 // pred_fallthru
      _
  $region6: #{selfc_invnet_forward.3} parent=0 // loop_footer
    %s18 = sadd.s32 1, %s14
  $region7: #{selfc_invnet_forward.3} parent=0 // loop_footer_branch
    %13 = sbr.rel target = $region3
  $region8: #{selfc_invnet_forward.3} parent=0 // loop_exit
    _

</llo_original>
